<compile_context>
chip_gen: v5e
topology: v5e:2x2
jax: 0.10.0
libtpu: 0.0.40
codegen_flags: <defaults>
</compile_context>

<pallas_src>
import functools

import jax
import jax.numpy as jnp
from jax.experimental import pallas as pl
from jax.experimental.pallas import tpu as pltpu

LEAK = 0.2
EPS = 1e-5


def _leaky(y):
    return jnp.where(y >= 0, y, LEAK * y)


def _bn_roll_fold(y, gamma, beta, inv_count, c_stride):
    """Training-mode BatchNorm2d on the (rows, W*C) layout.

    Lane index = w*C + c.  The per-channel fold (sum over w at fixed c, result
    broadcast back over w) is a cyclic log2(W) roll-add tree over the lane
    axis: exact in f32, runs on the XLU/VPU, no MXU involvement.  Requires W
    (= lanes / c_stride) to be a power of two.
    """
    s = jnp.sum(y, axis=0, keepdims=True)        # (1, L) column sums
    ss = jnp.sum(y * y, axis=0, keepdims=True)   # (1, L) column sums of squares
    lanes = y.shape[1]
    shift = c_stride
    while shift < lanes:                         # log2(W) steps, static unroll
        s = s + pltpu.roll(s, shift=shift, axis=1)
        ss = ss + pltpu.roll(ss, shift=shift, axis=1)
        shift *= 2
    mean = s * inv_count
    var = ss * inv_count - mean * mean           # biased variance
    scale = gamma * jax.lax.rsqrt(var + EPS)
    return y * scale + (beta - mean * scale)     # single FMA pass


def _bn_dot_fold(y, a, gamma, beta, inv_count):
    """Same BN, but the lane->channel fold uses a tiny 0/1 matrix `a`.

    Used for the 64-wide lane axis of BN3.  HIGHEST precision keeps the
    statistics effectively f32 through the MXU.
    """
    s = jnp.sum(y, axis=0, keepdims=True)
    ss = jnp.sum(y * y, axis=0, keepdims=True)
    sum_c = jnp.dot(s, a, precision=jax.lax.Precision.HIGHEST,
                    preferred_element_type=jnp.float32)
    sq_c = jnp.dot(ss, a, precision=jax.lax.Precision.HIGHEST,
                   preferred_element_type=jnp.float32)
    mean = sum_c * inv_count
    var = sq_c * inv_count - mean * mean
    scale = gamma * jax.lax.rsqrt(var + EPS)
    return y * scale + (beta - mean * scale)


def residual_encoder_block_kernel(
    x_ref, w1_ref, w2_ref, w3_ref, a3_ref,
    g1_ref, b1_ref, g2_ref, b2_ref, g3_ref, b3_ref,
    o_ref, *, H, C2, inv_count,
):
    x = x_ref[...]                                              # (R, W*C) f32
    R = x.shape[0]
    bf16 = jnp.bfloat16

    # ---- conv1 (1x1) block-diagonal lane matmul -> LeakyReLU -> BN1 ----
    y = jnp.dot(x.astype(bf16), w1_ref[...],
                preferred_element_type=jnp.float32)             # (R, W*C2)
    y = _leaky(y)
    y = _bn_roll_fold(y, g1_ref[...], b1_ref[...], inv_count, C2)

    # ---- conv2 (3x3, pad=1): height taps on XLU (roll) + VPU (mask), ----
    # ---- width + channel taps in ONE stacked banded matmul (K = 3*W*C2) ----
    r = jax.lax.broadcasted_iota(jnp.int32, (R, 1), 0)
    m_up = (r % H != 0).astype(jnp.float32)                     # zero at top row of each image
    m_dn = (r % H != H - 1).astype(jnp.float32)                 # zero at bottom row
    y_up = pltpu.roll(y, shift=1, axis=0) * m_up                # row h-1
    y_dn = pltpu.roll(y, shift=R - 1, axis=0) * m_dn            # row h+1
    ycat = jnp.concatenate([y_up, y, y_dn], axis=1)             # (R, 3*W*C2)
    y = jnp.dot(ycat.astype(bf16), w2_ref[...],
                preferred_element_type=jnp.float32)             # (R, W*C2)
    y = _leaky(y)
    y = _bn_roll_fold(y, g2_ref[...], b2_ref[...], inv_count, C2)

    # ---- conv3 (1x1) -> LeakyReLU -> BN3 (64-wide lanes -> dot fold) ----
    y = jnp.dot(y.astype(bf16), w3_ref[...],
                preferred_element_type=jnp.float32)             # (R, W*C)
    y = _leaky(y)
    y = _bn_dot_fold(y, a3_ref[...], g3_ref[...], b3_ref[...], inv_count)

    # ---- residual (x stays f32 end-to-end) ----
    o_ref[...] = (x + y).astype(o_ref.dtype)


def _prepare_operands(N, H, W, params):
    """Fold spatial width into the weights (done ONCE per weight set)."""
    w1, w2, w3, g1, b1, g2, b2, g3, b3 = params
    C, C2 = w1.shape
    f32, bf16 = jnp.float32, jnp.bfloat16
    eye_w = jnp.eye(W, dtype=f32)

    # 1x1 convs -> block-diagonal operators on the (w, c) lane axis (bf16:
    # DEFAULT MXU precision truncates to bf16 anyway; halves VMEM/DMA).
    w1bd = jnp.kron(eye_w, w1.astype(f32)).astype(bf16)         # (W*C,  W*C2)
    w3bd = jnp.kron(eye_w, w3.astype(f32)).astype(bf16)         # (W*C2, W*C)

    # 3x3 conv: banded operator per height tap dh,
    #   op[dh, wi*C2+ci, wo*C2+co] = w2[dh, wi-wo+1, ci, co]  if |wi-wo| <= 1,
    # stacked vertically so the kernel does one (R, 3*W*C2)@(3*W*C2, W*C2) dot.
    wi = jnp.arange(W)[:, None]
    wo = jnp.arange(W)[None, :]
    dw = wi - wo + 1                                            # (W, W)
    valid = (dw >= 0) & (dw <= 2)
    w2b = w2.astype(f32)[:, jnp.clip(dw, 0, 2)]                 # (3, W, W, C2, C2)
    w2b = jnp.where(valid[None, :, :, None, None], w2b, 0.0)
    w2b = jnp.transpose(w2b, (0, 1, 3, 2, 4)).reshape(3 * W * C2, W * C2)
    w2stack = w2b.astype(bf16)                                  # (3*W*C2, W*C2)

    # BN3 lane-total -> per-channel-total broadcast operator (tiny, kept f32).
    a3 = jnp.kron(jnp.ones((W, W), f32), jnp.eye(C, dtype=f32))  # (W*C, W*C)

    # BN affine params tiled onto the (w, c) lane axis.
    def lane(p, nc):
        return jnp.tile(p.astype(f32).reshape(1, nc), (1, W))

    return (w1bd, w2stack, w3bd, a3,
            lane(g1, C2), lane(b1, C2), lane(g2, C2), lane(b2, C2),
            lane(g3, C), lane(b3, C))


def make_residual_encoder_block(N, H, W, params):
    """Precompute operators once; return a jitted NHWC forward function."""
    w1 = params[0]
    C, C2 = w1.shape
    assert W & (W - 1) == 0, "roll-tree BN fold assumes W is a power of two"
    assert (W * C2) % 128 == 0, "BN1/BN2 lane width must be a multiple of 128"
    assert (N * H) % 8 == 0

    ops = _prepare_operands(N, H, W, params)      # runs eagerly, once
    R, L_in = N * H, W * C
    inv_count = 1.0 / (N * H * W)

    kernel = functools.partial(
        residual_encoder_block_kernel, H=H, C2=C2, inv_count=inv_count)
    vmem = functools.partial(pl.BlockSpec, memory_space=pltpu.MemorySpace.VMEM)

    call = pl.pallas_call(
        kernel,
        out_shape=jax.ShapeDtypeStruct((R, L_in), jnp.float32),
        in_specs=[vmem() for _ in range(1 + len(ops))],
        out_specs=vmem(),
        input_output_aliases={0: 0},              # output reuses x's buffer
    )

    @jax.jit
    def fwd(x_nhwc):
        x2d = x_nhwc.reshape(R, L_in)             # lane-dense view
        out2d = call(x2d, *ops)
        return out2d.reshape(N, H, W, C)

    return fwd


def reference_nhwc(x, params):
    """Pure-JAX (f32, HIGHEST precision) reference of the PyTorch forward."""
    w1, w2, w3, g1, b1, g2, b2, g3, b3 = params

    def bn(y, g, b):
        m = jnp.mean(y, axis=(0, 1, 2), keepdims=True)
        v = jnp.mean((y - m) ** 2, axis=(0, 1, 2), keepdims=True)
        return (y - m) * jax.lax.rsqrt(v + EPS) * g.reshape(1, 1, 1, -1) \
            + b.reshape(1, 1, 1, -1)

    y = jnp.einsum('nhwc,co->nhwo', x, w1, precision=jax.lax.Precision.HIGHEST)
    y = bn(_leaky(y), g1, b1)
    y = jax.lax.conv_general_dilated(
        y, w2, window_strides=(1, 1), padding='SAME',
        dimension_numbers=('NHWC', 'HWIO', 'NHWC'),
        precision=jax.lax.Precision.HIGHEST)
    y = bn(_leaky(y), g2, b2)
    y = jnp.einsum('nhwc,co->nhwo', y, w3, precision=jax.lax.Precision.HIGHEST)
    y = bn(_leaky(y), g3, b3)
    return x + y


if __name__ == "__main__":
    dim = 4                     # PyTorch: Conv2d(dim, 2*dim, ...)
    N, H, W = 2, 16, 16
    C2 = 2 * dim

    key = jax.random.PRNGKey(0)
    ks = jax.random.split(key, 10)

    # Parameter shapes follow the module __init__:
    #   w1: 1x1 (C -> C2), w2: 3x3 HWIO (C2 -> C2), w3: 1x1 (C2 -> C).
    w1 = jax.random.normal(ks[0], (dim, C2), jnp.float32) / jnp.sqrt(dim)
    w2 = jax.random.normal(ks[1], (3, 3, C2, C2), jnp.float32) / jnp.sqrt(9 * C2)
    w3 = jax.random.normal(ks[2], (C2, dim), jnp.float32) / jnp.sqrt(C2)
    g1 = 1.0 + 0.1 * jax.random.normal(ks[3], (C2,), jnp.float32)
    b1 = 0.1 * jax.random.normal(ks[4], (C2,), jnp.float32)
    g2 = 1.0 + 0.1 * jax.random.normal(ks[5], (C2,), jnp.float32)
    b2 = 0.1 * jax.random.normal(ks[6], (C2,), jnp.float32)
    g3 = 1.0 + 0.1 * jax.random.normal(ks[7], (dim,), jnp.float32)
    b3 = 0.1 * jax.random.normal(ks[8], (dim,), jnp.float32)
    params = (w1, w2, w3, g1, b1, g2, b2, g3, b3)

    # NHWC end-to-end (no NCHW<->NHWC HBM round-trips around the kernel);
    # equivalent PyTorch input shape is (N, C, H, W) = (2, 4, 16, 16).
    x_nhwc = jax.random.normal(ks[9], (N, H, W, dim), jnp.float32)

    fwd = make_residual_encoder_block(N, H, W, params)
    out = fwd(x_nhwc)
    jax.block_until_ready(out)

    ref = reference_nhwc(x_nhwc, params)

    assert out.shape == x_nhwc.shape
    # Tolerance covers single-pass bf16 MXU conv matmuls vs the f32 HIGHEST
    # reference (BN statistics are now exact f32, so error is conv-only).
    err = jnp.max(jnp.abs(out - ref))
    assert jnp.allclose(out, ref, atol=5e-2, rtol=5e-2), (
        f"mismatch vs reference: max abs err {err}")

    print("KERNEL_OK")
</pallas_src>

<mosaic_0001>
module attributes {stable_mosaic.version = 11 : i64} {
  func.func @residual_encoder_block_kernel(%arg0: memref<32x64xf32, #tpu.memory_space<vmem>>, %arg1: memref<64x128xbf16, #tpu.memory_space<vmem>>, %arg2: memref<384x128xbf16, #tpu.memory_space<vmem>>, %arg3: memref<128x64xbf16, #tpu.memory_space<vmem>>, %arg4: memref<64x64xf32, #tpu.memory_space<vmem>>, %arg5: memref<1x128xf32, #tpu.memory_space<vmem>>, %arg6: memref<1x128xf32, #tpu.memory_space<vmem>>, %arg7: memref<1x128xf32, #tpu.memory_space<vmem>>, %arg8: memref<1x128xf32, #tpu.memory_space<vmem>>, %arg9: memref<1x64xf32, #tpu.memory_space<vmem>>, %arg10: memref<1x64xf32, #tpu.memory_space<vmem>>, %arg11: memref<32x64xf32, #tpu.memory_space<vmem>>) attributes {dimension_semantics = [], scalar_prefetch = 0 : i64, scratch_operands = 0 : i64, tpu.core_type = #tpu.core_type<tc>} {
    %c0 = arith.constant 0 : index
    %c0_0 = arith.constant 0 : index
    %0 = vector.load %arg0[%c0, %c0_0] : memref<32x64xf32, #tpu.memory_space<vmem>>, vector<32x64xf32>
    %1 = arith.truncf %0 : vector<32x64xf32> to vector<32x64xbf16>
    %c0_1 = arith.constant 0 : index
    %c0_2 = arith.constant 0 : index
    %2 = vector.load %arg1[%c0_1, %c0_2] : memref<64x128xbf16, #tpu.memory_space<vmem>>, vector<64x128xbf16>
    %cst = arith.constant dense<0.000000e+00> : vector<32x128xf32>
    %3 = tpu.matmul %1, %2, %cst {dimension_numbers = #tpu.dot_dimension_numbers<[1], [0], [0], [1], [0, 0, 1, 1], [], []>} : vector<32x64xbf16>, vector<64x128xbf16>, vector<32x128xf32> -> vector<32x128xf32>
    %cst_3 = arith.constant 0.000000e+00 : f32
    %4 = vector.broadcast %cst_3 : f32 to vector<32x128xf32>
    %5 = arith.cmpf oge, %3, %4 : vector<32x128xf32>
    %cst_4 = arith.constant 2.000000e-01 : f32
    %6 = vector.broadcast %cst_4 : f32 to vector<32x128xf32>
    %7 = arith.mulf %6, %3 : vector<32x128xf32>
    %8 = arith.select %5, %3, %7 : vector<32x128xi1>, vector<32x128xf32>
    %c0_5 = arith.constant 0 : index
    %c0_6 = arith.constant 0 : index
    %9 = vector.load %arg5[%c0_5, %c0_6] : memref<1x128xf32, #tpu.memory_space<vmem>>, vector<1x128xf32>
    %c0_7 = arith.constant 0 : index
    %c0_8 = arith.constant 0 : index
    %10 = vector.load %arg6[%c0_7, %c0_8] : memref<1x128xf32, #tpu.memory_space<vmem>>, vector<1x128xf32>
    %cst_9 = arith.constant dense<0.000000e+00> : vector<128xf32>
    %11 = vector.multi_reduction <add>, %8, %cst_9 [0] : vector<32x128xf32> to vector<128xf32>
    %12 = vector.shape_cast %11 : vector<128xf32> to vector<1x128xf32>
    %13 = arith.mulf %8, %8 : vector<32x128xf32>
    %cst_10 = arith.constant dense<0.000000e+00> : vector<128xf32>
    %14 = vector.multi_reduction <add>, %13, %cst_10 [0] : vector<32x128xf32> to vector<128xf32>
    %15 = vector.shape_cast %14 : vector<128xf32> to vector<1x128xf32>
    %c8_i32 = arith.constant 8 : i32
    %16 = tpu.dynamic_rotate %12 by %c8_i32 dim 1 : vector<1x128xf32>, i32 -> vector<1x128xf32>
    %17 = arith.addf %12, %16 : vector<1x128xf32>
    %c8_i32_11 = arith.constant 8 : i32
    %18 = tpu.dynamic_rotate %15 by %c8_i32_11 dim 1 : vector<1x128xf32>, i32 -> vector<1x128xf32>
    %19 = arith.addf %15, %18 : vector<1x128xf32>
    %c16_i32 = arith.constant 16 : i32
    %20 = tpu.dynamic_rotate %17 by %c16_i32 dim 1 : vector<1x128xf32>, i32 -> vector<1x128xf32>
    %21 = arith.addf %17, %20 : vector<1x128xf32>
    %c16_i32_12 = arith.constant 16 : i32
    %22 = tpu.dynamic_rotate %19 by %c16_i32_12 dim 1 : vector<1x128xf32>, i32 -> vector<1x128xf32>
    %23 = arith.addf %19, %22 : vector<1x128xf32>
    %c32_i32 = arith.constant 32 : i32
    %24 = tpu.dynamic_rotate %21 by %c32_i32 dim 1 : vector<1x128xf32>, i32 -> vector<1x128xf32>
    %25 = arith.addf %21, %24 : vector<1x128xf32>
    %c32_i32_13 = arith.constant 32 : i32
    %26 = tpu.dynamic_rotate %23 by %c32_i32_13 dim 1 : vector<1x128xf32>, i32 -> vector<1x128xf32>
    %27 = arith.addf %23, %26 : vector<1x128xf32>
    %c64_i32 = arith.constant 64 : i32
    %28 = tpu.dynamic_rotate %25 by %c64_i32 dim 1 : vector<1x128xf32>, i32 -> vector<1x128xf32>
    %29 = arith.addf %25, %28 : vector<1x128xf32>
    %c64_i32_14 = arith.constant 64 : i32
    %30 = tpu.dynamic_rotate %27 by %c64_i32_14 dim 1 : vector<1x128xf32>, i32 -> vector<1x128xf32>
    %31 = arith.addf %27, %30 : vector<1x128xf32>
    %cst_15 = arith.constant 0.001953125 : f32
    %32 = vector.broadcast %cst_15 : f32 to vector<1x128xf32>
    %33 = arith.mulf %29, %32 : vector<1x128xf32>
    %cst_16 = arith.constant 0.001953125 : f32
    %34 = vector.broadcast %cst_16 : f32 to vector<1x128xf32>
    %35 = arith.mulf %31, %34 : vector<1x128xf32>
    %36 = arith.mulf %33, %33 : vector<1x128xf32>
    %37 = arith.subf %35, %36 : vector<1x128xf32>
    %cst_17 = arith.constant 9.99999974E-6 : f32
    %38 = vector.broadcast %cst_17 : f32 to vector<1x128xf32>
    %39 = arith.addf %37, %38 : vector<1x128xf32>
    %40 = math.rsqrt %39 : vector<1x128xf32>
    %41 = arith.mulf %9, %40 : vector<1x128xf32>
    %42 = vector.broadcast %41 : vector<1x128xf32> to vector<32x128xf32>
    %43 = arith.mulf %8, %42 : vector<32x128xf32>
    %44 = arith.mulf %33, %41 : vector<1x128xf32>
    %45 = arith.subf %10, %44 : vector<1x128xf32>
    %46 = vector.broadcast %45 : vector<1x128xf32> to vector<32x128xf32>
    %47 = arith.addf %43, %46 : vector<32x128xf32>
    %48 = tpu.iota {dimensions = array<i32: 0>} : vector<32x1xi32>
    %c16_i32_18 = arith.constant 16 : i32
    %c0_i32 = arith.constant 0 : i32
    %49 = arith.cmpi eq, %c16_i32_18, %c0_i32 : i32
    %c1_i32 = arith.constant 1 : i32
    %50 = arith.select %49, %c1_i32, %c16_i32_18 : i32
    %51 = vector.broadcast %50 : i32 to vector<32x1xi32>
    %52 = arith.remsi %48, %51 : vector<32x1xi32>
    %c0_i32_19 = arith.constant 0 : i32
    %53 = vector.broadcast %c0_i32_19 : i32 to vector<32x1xi32>
    %54 = arith.cmpi ne, %52, %53 : vector<32x1xi32>
    %c0_i32_20 = arith.constant 0 : i32
    %55 = vector.broadcast %c0_i32_20 : i32 to vector<32x1xi32>
    %56 = arith.cmpi slt, %52, %55 : vector<32x1xi32>
    %c0_i32_21 = arith.constant 0 : i32
    %57 = arith.cmpi slt, %50, %c0_i32_21 : i32
    %58 = vector.broadcast %57 : i1 to vector<32x1xi1>
    %59 = vector.broadcast %58 : vector<32x1xi1> to vector<32x1xi1>
    %60 = arith.xori %56, %59 : vector<32x1xi1>
    %61 = arith.andi %60, %54 : vector<32x1xi1>
    %62 = vector.broadcast %50 : i32 to vector<32x1xi32>
    %63 = arith.addi %52, %62 : vector<32x1xi32>
    %64 = arith.select %61, %63, %52 : vector<32x1xi1>, vector<32x1xi32>
    %c0_i32_22 = arith.constant 0 : i32
    %65 = vector.broadcast %c0_i32_22 : i32 to vector<32x1xi32>
    %66 = arith.cmpi ne, %64, %65 : vector<32x1xi32>
    %67 = arith.extui %66 : vector<32x1xi1> to vector<32x1xi32>
    %68 = arith.sitofp %67 : vector<32x1xi32> to vector<32x1xf32>
    %c16_i32_23 = arith.constant 16 : i32
    %c0_i32_24 = arith.constant 0 : i32
    %69 = arith.cmpi eq, %c16_i32_23, %c0_i32_24 : i32
    %c1_i32_25 = arith.constant 1 : i32
    %70 = arith.select %69, %c1_i32_25, %c16_i32_23 : i32
    %71 = vector.broadcast %70 : i32 to vector<32x1xi32>
    %72 = arith.remsi %48, %71 : vector<32x1xi32>
    %c0_i32_26 = arith.constant 0 : i32
    %73 = vector.broadcast %c0_i32_26 : i32 to vector<32x1xi32>
    %74 = arith.cmpi ne, %72, %73 : vector<32x1xi32>
    %c0_i32_27 = arith.constant 0 : i32
    %75 = vector.broadcast %c0_i32_27 : i32 to vector<32x1xi32>
    %76 = arith.cmpi slt, %72, %75 : vector<32x1xi32>
    %c0_i32_28 = arith.constant 0 : i32
    %77 = arith.cmpi slt, %70, %c0_i32_28 : i32
    %78 = vector.broadcast %77 : i1 to vector<32x1xi1>
    %79 = vector.broadcast %78 : vector<32x1xi1> to vector<32x1xi1>
    %80 = arith.xori %76, %79 : vector<32x1xi1>
    %81 = arith.andi %80, %74 : vector<32x1xi1>
    %82 = vector.broadcast %70 : i32 to vector<32x1xi32>
    %83 = arith.addi %72, %82 : vector<32x1xi32>
    %84 = arith.select %81, %83, %72 : vector<32x1xi1>, vector<32x1xi32>
    %c15_i32 = arith.constant 15 : i32
    %85 = vector.broadcast %c15_i32 : i32 to vector<32x1xi32>
    %86 = arith.cmpi ne, %84, %85 : vector<32x1xi32>
    %87 = arith.extui %86 : vector<32x1xi1> to vector<32x1xi32>
    %88 = arith.sitofp %87 : vector<32x1xi32> to vector<32x1xf32>
    %c1_i32_29 = arith.constant 1 : i32
    %89 = tpu.dynamic_rotate %47 by %c1_i32_29 dim 0 : vector<32x128xf32>, i32 -> vector<32x128xf32>
    %90 = vector.broadcast %68 : vector<32x1xf32> to vector<32x128xf32>
    %91 = arith.mulf %89, %90 : vector<32x128xf32>
    %c31_i32 = arith.constant 31 : i32
    %92 = tpu.dynamic_rotate %47 by %c31_i32 dim 0 : vector<32x128xf32>, i32 -> vector<32x128xf32>
    %93 = vector.broadcast %88 : vector<32x1xf32> to vector<32x128xf32>
    %94 = arith.mulf %92, %93 : vector<32x128xf32>
    %95 = tpu.concatenate %91, %47, %94 in 1 : vector<32x128xf32>, vector<32x128xf32>, vector<32x128xf32> -> vector<32x384xf32>
    %96 = arith.truncf %95 : vector<32x384xf32> to vector<32x384xbf16>
    %c0_30 = arith.constant 0 : index
    %c0_31 = arith.constant 0 : index
    %97 = vector.load %arg2[%c0_30, %c0_31] : memref<384x128xbf16, #tpu.memory_space<vmem>>, vector<384x128xbf16>
    %cst_32 = arith.constant dense<0.000000e+00> : vector<32x128xf32>
    %98 = tpu.matmul %96, %97, %cst_32 {dimension_numbers = #tpu.dot_dimension_numbers<[1], [0], [0], [1], [0, 0, 1, 1], [], []>} : vector<32x384xbf16>, vector<384x128xbf16>, vector<32x128xf32> -> vector<32x128xf32>
    %cst_33 = arith.constant 0.000000e+00 : f32
    %99 = vector.broadcast %cst_33 : f32 to vector<32x128xf32>
    %100 = arith.cmpf oge, %98, %99 : vector<32x128xf32>
    %cst_34 = arith.constant 2.000000e-01 : f32
    %101 = vector.broadcast %cst_34 : f32 to vector<32x128xf32>
    %102 = arith.mulf %101, %98 : vector<32x128xf32>
    %103 = arith.select %100, %98, %102 : vector<32x128xi1>, vector<32x128xf32>
    %c0_35 = arith.constant 0 : index
    %c0_36 = arith.constant 0 : index
    %104 = vector.load %arg7[%c0_35, %c0_36] : memref<1x128xf32, #tpu.memory_space<vmem>>, vector<1x128xf32>
    %c0_37 = arith.constant 0 : index
    %c0_38 = arith.constant 0 : index
    %105 = vector.load %arg8[%c0_37, %c0_38] : memref<1x128xf32, #tpu.memory_space<vmem>>, vector<1x128xf32>
    %cst_39 = arith.constant dense<0.000000e+00> : vector<128xf32>
    %106 = vector.multi_reduction <add>, %103, %cst_39 [0] : vector<32x128xf32> to vector<128xf32>
    %107 = vector.shape_cast %106 : vector<128xf32> to vector<1x128xf32>
    %108 = arith.mulf %103, %103 : vector<32x128xf32>
    %cst_40 = arith.constant dense<0.000000e+00> : vector<128xf32>
    %109 = vector.multi_reduction <add>, %108, %cst_40 [0] : vector<32x128xf32> to vector<128xf32>
    %110 = vector.shape_cast %109 : vector<128xf32> to vector<1x128xf32>
    %c8_i32_41 = arith.constant 8 : i32
    %111 = tpu.dynamic_rotate %107 by %c8_i32_41 dim 1 : vector<1x128xf32>, i32 -> vector<1x128xf32>
    %112 = arith.addf %107, %111 : vector<1x128xf32>
    %c8_i32_42 = arith.constant 8 : i32
    %113 = tpu.dynamic_rotate %110 by %c8_i32_42 dim 1 : vector<1x128xf32>, i32 -> vector<1x128xf32>
    %114 = arith.addf %110, %113 : vector<1x128xf32>
    %c16_i32_43 = arith.constant 16 : i32
    %115 = tpu.dynamic_rotate %112 by %c16_i32_43 dim 1 : vector<1x128xf32>, i32 -> vector<1x128xf32>
    %116 = arith.addf %112, %115 : vector<1x128xf32>
    %c16_i32_44 = arith.constant 16 : i32
    %117 = tpu.dynamic_rotate %114 by %c16_i32_44 dim 1 : vector<1x128xf32>, i32 -> vector<1x128xf32>
    %118 = arith.addf %114, %117 : vector<1x128xf32>
    %c32_i32_45 = arith.constant 32 : i32
    %119 = tpu.dynamic_rotate %116 by %c32_i32_45 dim 1 : vector<1x128xf32>, i32 -> vector<1x128xf32>
    %120 = arith.addf %116, %119 : vector<1x128xf32>
    %c32_i32_46 = arith.constant 32 : i32
    %121 = tpu.dynamic_rotate %118 by %c32_i32_46 dim 1 : vector<1x128xf32>, i32 -> vector<1x128xf32>
    %122 = arith.addf %118, %121 : vector<1x128xf32>
    %c64_i32_47 = arith.constant 64 : i32
    %123 = tpu.dynamic_rotate %120 by %c64_i32_47 dim 1 : vector<1x128xf32>, i32 -> vector<1x128xf32>
    %124 = arith.addf %120, %123 : vector<1x128xf32>
    %c64_i32_48 = arith.constant 64 : i32
    %125 = tpu.dynamic_rotate %122 by %c64_i32_48 dim 1 : vector<1x128xf32>, i32 -> vector<1x128xf32>
    %126 = arith.addf %122, %125 : vector<1x128xf32>
    %cst_49 = arith.constant 0.001953125 : f32
    %127 = vector.broadcast %cst_49 : f32 to vector<1x128xf32>
    %128 = arith.mulf %124, %127 : vector<1x128xf32>
    %cst_50 = arith.constant 0.001953125 : f32
    %129 = vector.broadcast %cst_50 : f32 to vector<1x128xf32>
    %130 = arith.mulf %126, %129 : vector<1x128xf32>
    %131 = arith.mulf %128, %128 : vector<1x128xf32>
    %132 = arith.subf %130, %131 : vector<1x128xf32>
    %cst_51 = arith.constant 9.99999974E-6 : f32
    %133 = vector.broadcast %cst_51 : f32 to vector<1x128xf32>
    %134 = arith.addf %132, %133 : vector<1x128xf32>
    %135 = math.rsqrt %134 : vector<1x128xf32>
    %136 = arith.mulf %104, %135 : vector<1x128xf32>
    %137 = vector.broadcast %136 : vector<1x128xf32> to vector<32x128xf32>
    %138 = arith.mulf %103, %137 : vector<32x128xf32>
    %139 = arith.mulf %128, %136 : vector<1x128xf32>
    %140 = arith.subf %105, %139 : vector<1x128xf32>
    %141 = vector.broadcast %140 : vector<1x128xf32> to vector<32x128xf32>
    %142 = arith.addf %138, %141 : vector<32x128xf32>
    %143 = arith.truncf %142 : vector<32x128xf32> to vector<32x128xbf16>
    %c0_52 = arith.constant 0 : index
    %c0_53 = arith.constant 0 : index
    %144 = vector.load %arg3[%c0_52, %c0_53] : memref<128x64xbf16, #tpu.memory_space<vmem>>, vector<128x64xbf16>
    %cst_54 = arith.constant dense<0.000000e+00> : vector<32x64xf32>
    %145 = tpu.matmul %143, %144, %cst_54 {dimension_numbers = #tpu.dot_dimension_numbers<[1], [0], [0], [1], [0, 0, 1, 1], [], []>} : vector<32x128xbf16>, vector<128x64xbf16>, vector<32x64xf32> -> vector<32x64xf32>
    %cst_55 = arith.constant 0.000000e+00 : f32
    %146 = vector.broadcast %cst_55 : f32 to vector<32x64xf32>
    %147 = arith.cmpf oge, %145, %146 : vector<32x64xf32>
    %cst_56 = arith.constant 2.000000e-01 : f32
    %148 = vector.broadcast %cst_56 : f32 to vector<32x64xf32>
    %149 = arith.mulf %148, %145 : vector<32x64xf32>
    %150 = arith.select %147, %145, %149 : vector<32x64xi1>, vector<32x64xf32>
    %c0_57 = arith.constant 0 : index
    %c0_58 = arith.constant 0 : index
    %151 = vector.load %arg4[%c0_57, %c0_58] : memref<64x64xf32, #tpu.memory_space<vmem>>, vector<64x64xf32>
    %c0_59 = arith.constant 0 : index
    %c0_60 = arith.constant 0 : index
    %152 = vector.load %arg9[%c0_59, %c0_60] : memref<1x64xf32, #tpu.memory_space<vmem>>, vector<1x64xf32>
    %c0_61 = arith.constant 0 : index
    %c0_62 = arith.constant 0 : index
    %153 = vector.load %arg10[%c0_61, %c0_62] : memref<1x64xf32, #tpu.memory_space<vmem>>, vector<1x64xf32>
    %cst_63 = arith.constant dense<0.000000e+00> : vector<64xf32>
    %154 = vector.multi_reduction <add>, %150, %cst_63 [0] : vector<32x64xf32> to vector<64xf32>
    %155 = vector.shape_cast %154 : vector<64xf32> to vector<1x64xf32>
    %156 = arith.mulf %150, %150 : vector<32x64xf32>
    %cst_64 = arith.constant dense<0.000000e+00> : vector<64xf32>
    %157 = vector.multi_reduction <add>, %156, %cst_64 [0] : vector<32x64xf32> to vector<64xf32>
    %158 = vector.shape_cast %157 : vector<64xf32> to vector<1x64xf32>
    %cst_65 = arith.constant dense<0.000000e+00> : vector<1x64xf32>
    %159 = tpu.matmul %155, %151, %cst_65 {dimension_numbers = #tpu.dot_dimension_numbers<[1], [0], [0], [1], [0, 0, 1, 1], [], []>, precision = #tpu.contract_precision<fp32>} : vector<1x64xf32>, vector<64x64xf32>, vector<1x64xf32> -> vector<1x64xf32>
    %cst_66 = arith.constant dense<0.000000e+00> : vector<1x64xf32>
    %160 = tpu.matmul %158, %151, %cst_66 {dimension_numbers = #tpu.dot_dimension_numbers<[1], [0], [0], [1], [0, 0, 1, 1], [], []>, precision = #tpu.contract_precision<fp32>} : vector<1x64xf32>, vector<64x64xf32>, vector<1x64xf32> -> vector<1x64xf32>
    %cst_67 = arith.constant 0.001953125 : f32
    %161 = vector.broadcast %cst_67 : f32 to vector<1x64xf32>
    %162 = arith.mulf %159, %161 : vector<1x64xf32>
    %cst_68 = arith.constant 0.001953125 : f32
    %163 = vector.broadcast %cst_68 : f32 to vector<1x64xf32>
    %164 = arith.mulf %160, %163 : vector<1x64xf32>
    %165 = arith.mulf %162, %162 : vector<1x64xf32>
    %166 = arith.subf %164, %165 : vector<1x64xf32>
    %cst_69 = arith.constant 9.99999974E-6 : f32
    %167 = vector.broadcast %cst_69 : f32 to vector<1x64xf32>
    %168 = arith.addf %166, %167 : vector<1x64xf32>
    %169 = math.rsqrt %168 : vector<1x64xf32>
    %170 = arith.mulf %152, %169 : vector<1x64xf32>
    %171 = vector.broadcast %170 : vector<1x64xf32> to vector<32x64xf32>
    %172 = arith.mulf %150, %171 : vector<32x64xf32>
    %173 = arith.mulf %162, %170 : vector<1x64xf32>
    %174 = arith.subf %153, %173 : vector<1x64xf32>
    %175 = vector.broadcast %174 : vector<1x64xf32> to vector<32x64xf32>
    %176 = arith.addf %172, %175 : vector<32x64xf32>
    %177 = arith.addf %0, %176 : vector<32x64xf32>
    %c0_70 = arith.constant 0 : index
    %c0_71 = arith.constant 0 : index
    %178 = vector.load %arg11[%c0_70, %c0_71] : memref<32x64xf32, #tpu.memory_space<vmem>>, vector<32x64xf32>
    tpu.vector_store %arg11[%c0_70, %c0_71], %177 {strides = array<i32>} : memref<32x64xf32, #tpu.memory_space<vmem>>, vector<32x64xf32>,
    return
  }
}

</mosaic_0001>

<llo_original>
// kernel: fwd.1
$region0: #{fwd.1}
  #allocation0 [shape = 'u32[]', space=smem, size = 0x4, offset = 0x4, fixed_abs, tag = 'smem constant byte address 0x4 - core index']
  #allocation1 [shape = 'u32[72,128]{1,0:T(1,128)}', space=vmem, size = 0x9000, scoped, tag = 'internal scratch']
  %s0 = inlined_call_operand.vmem [shape: f32[32,64], index: 0, kind: input, shape index: {}, may-alias: {0,11}]
  %s1 = inlined_call_operand.vmem [shape: bf16[64,128], index: 1, kind: input, shape index: {}]
  %s2 = inlined_call_operand.vmem [shape: bf16[384,128], index: 2, kind: input, shape index: {}]
  %s3 = inlined_call_operand.vmem [shape: bf16[128,64], index: 3, kind: input, shape index: {}]
  %s4 = inlined_call_operand.vmem [shape: f32[64,64], index: 4, kind: input, shape index: {}]
  %s5 = inlined_call_operand.vmem [shape: f32[1,128], index: 5, kind: input, shape index: {}]
  %s6 = inlined_call_operand.vmem [shape: f32[1,128], index: 6, kind: input, shape index: {}]
  %s7 = inlined_call_operand.vmem [shape: f32[1,128], index: 7, kind: input, shape index: {}]
  %s8 = inlined_call_operand.vmem [shape: f32[1,128], index: 8, kind: input, shape index: {}]
  %s9 = inlined_call_operand.vmem [shape: f32[1,64], index: 9, kind: input, shape index: {}]
  %s10 = inlined_call_operand.vmem [shape: f32[1,64], index: 10, kind: input, shape index: {}]
  %s11 = inlined_call_operand.vmem [shape: f32[32,64], index: 11, kind: output, shape index: {}, may-alias: {0,11}]
  %s12 = sld [smem:[#allocation0]]
  $region54: #{fwd.1} parent=0
    _
  %s14 = ssub.s32 1, %s12
  %s15 = scalar_select 0, %s14, %s12
  // Predicated region
  $region2: #{fwd.1} parent=0 // pred_check
    _
  $region3: #{fwd.1} parent=0 // pred_check_branch
    %17 = sbr.rel (0) target = $region5
  $region4: #{fwd.1} parent=0 // pred_region
    _
  $region5: #{fwd.1} parent=0 // pred_fallthru
    _
  // Predicated region
  $region6: #{fwd.1} parent=0 // pred_check
    _
  $region7: #{fwd.1} parent=0 // pred_check_branch
    %19 = sbr.rel (0) target = $region9
  $region8: #{fwd.1} parent=0 // pred_region
    _
  $region9: #{fwd.1} parent=0 // pred_fallthru
    _
  // Predicated region
  $region10: #{fwd.1} parent=0 // pred_check
    _
  $region11: #{fwd.1} parent=0 // pred_check_branch
    %21 = sbr.rel (0) target = $region13
  $region12: #{fwd.1} parent=0 // pred_region
    _
  $region13: #{fwd.1} parent=0 // pred_fallthru
    _
  // Predicated region
  $region14: #{fwd.1} parent=0 // pred_check
    _
  $region15: #{fwd.1} parent=0 // pred_check_branch
    %23 = sbr.rel (0) target = $region17
  $region16: #{fwd.1} parent=0 // pred_region
    _
  $region17: #{fwd.1} parent=0 // pred_fallthru
    _
  // Predicated region
  $region18: #{fwd.1} parent=0 // pred_check
    _
  $region19: #{fwd.1} parent=0 // pred_check_branch
    %25 = sbr.rel (0) target = $region21
  $region20: #{fwd.1} parent=0 // pred_region
    _
  $region21: #{fwd.1} parent=0 // pred_fallthru
    _
  // Predicated region
  $region22: #{fwd.1} parent=0 // pred_check
    _
  $region23: #{fwd.1} parent=0 // pred_check_branch
    %27 = sbr.rel (0) target = $region25
  $region24: #{fwd.1} parent=0 // pred_region
    _
  $region25: #{fwd.1} parent=0 // pred_fallthru
    _
  // Predicated region
  $region26: #{fwd.1} parent=0 // pred_check
    _
  $region27: #{fwd.1} parent=0 // pred_check_branch
    %29 = sbr.rel (0) target = $region29
  $region28: #{fwd.1} parent=0 // pred_region
    _
  $region29: #{fwd.1} parent=0 // pred_fallthru
    _
  // Predicated region
  $region30: #{fwd.1} parent=0 // pred_check
    _
  $region31: #{fwd.1} parent=0 // pred_check_branch
    %31 = sbr.rel (0) target = $region33
  $region32: #{fwd.1} parent=0 // pred_region
    _
  $region33: #{fwd.1} parent=0 // pred_fallthru
    _
  // Predicated region
  $region34: #{fwd.1} parent=0 // pred_check
    _
  $region35: #{fwd.1} parent=0 // pred_check_branch
    %33 = sbr.rel (0) target = $region37
  $region36: #{fwd.1} parent=0 // pred_region
    _
  $region37: #{fwd.1} parent=0 // pred_fallthru
    _
  // Predicated region
  $region38: #{fwd.1} parent=0 // pred_check
    _
  $region39: #{fwd.1} parent=0 // pred_check_branch
    %35 = sbr.rel (0) target = $region41
  $region40: #{fwd.1} parent=0 // pred_region
    _
  $region41: #{fwd.1} parent=0 // pred_fallthru
    _
  // Predicated region
  $region42: #{fwd.1} parent=0 // pred_check
    _
  $region43: #{fwd.1} parent=0 // pred_check_branch
    %37 = sbr.rel (0) target = $region45
  $region44: #{fwd.1} parent=0 // pred_region
    _
  $region45: #{fwd.1} parent=0 // pred_fallthru
    _
  %v39 = vld [vmem:[%s0] sm:$0xff]
  %v40 = vld [vmem:[%s0 + $0x8] sm:$0xff]
  %v41 = vld [vmem:[%s0 + $0x10] sm:$0xff]
  %v42 = vld [vmem:[%s0 + $0x18] sm:$0xff]
  %v43 = vpack.c.bf16 %v40, %v39
  %v44 = vpack.c.bf16 %v42, %v41
  %v45 = vld [vmem:[%s1] sm:$0xf]
  %v46 = vld [vmem:[%s1 + $0x4] sm:$0xf]
  %v47 = vld [vmem:[%s1 + $0x8] sm:$0xf]
  %v48 = vld [vmem:[%s1 + $0xc] sm:$0xf]
  %v49 = vld [vmem:[%s1 + $0x10] sm:$0xf]
  %v50 = vld [vmem:[%s1 + $0x14] sm:$0xf]
  %v51 = vld [vmem:[%s1 + $0x18] sm:$0xf]
  %v52 = vld [vmem:[%s1 + $0x1c] sm:$0xf]
  %v61 = vunpack.c.l.b16 %v45
  %v62 = vunpack.c.l.b16 %v46
  %v63 = vunpack.c.l.b16 %v47
  %v64 = vunpack.c.l.b16 %v48
  %v65 = vunpack.c.l.b16 %v49
  %v66 = vunpack.c.l.b16 %v50
  %v67 = vunpack.c.l.b16 %v51
  %v68 = vunpack.c.l.b16 %v52
  %v69 = vpack.c.b16 %v62, %v61
  %v70 = vpack.c.b16 %v64, %v63
  %v71 = vpack.c.b16 %v66, %v65
  %v72 = vpack.c.b16 %v68, %v67
  %vm77 = vcmask 523264
  %v79 = vsel %vm77, %v43, 0
  %v82 = vsel %vm77, %v44, 0
  %84 = vmatpush.bf16.msra.mxu0 0
  %85 = vmatpush.bf16.msra.mxu0 0
  %86 = vmatpush.bf16.msra.mxu0 0
  %87 = vmatpush.bf16.msra.mxu0 0
  %88 = vmatpush.bf16.msra.mxu0 %v72
  %89 = vmatpush.bf16.msra.mxu0 %v71
  %90 = vmatpush.bf16.msra.mxu0 %v70
  %91 = vmatpush.bf16.msra.mxu0 %v69
  %92 = vmatmul.bf16.gmra.mxu0 %v79
  %v93 = vpop.f32.mrf.mxu0
  %v94 = vadd.f32 0.0, %v93
  %v95 = vpop.f32.mrf.mxu0
  %v96 = vadd.f32 0.0, %v95
  %97 = vmatmul.bf16.gmra.mxu0 %v82
  %v98 = vpop.f32.mrf.mxu0
  %v99 = vadd.f32 0.0, %v98
  %v100 = vpop.f32.mrf.mxu0
  %v101 = vadd.f32 0.0, %v100
  %102 = vdwg.mxu0
  %vm103 = vcmp.ge.f32.partialorder %v94, 0.0
  %vm104 = vcmp.ge.f32.partialorder %v96, 0.0
  %vm105 = vcmp.ge.f32.partialorder %v99, 0.0
  %vm106 = vcmp.ge.f32.partialorder %v101, 0.0
  %v107 = vmul.f32 %v94, 0.2
  %v108 = vmul.f32 %v96, 0.2
  %v109 = vmul.f32 %v99, 0.2
  %v110 = vmul.f32 %v101, 0.2
  %v111 = vsel %vm103, %v94, %v107
  %v112 = vsel %vm104, %v96, %v108
  %v113 = vsel %vm105, %v99, %v109
  %v114 = vsel %vm106, %v101, %v110
  %v115 = vld [vmem:[%s5] sm:$0x1]
  %v116 = vld [vmem:[%s6] sm:$0x1]
  %v117 = vadd.f32 %v111, %v112
  %v118 = vadd.f32 %v117, %v113
  %v119 = vadd.f32 %v118, %v114
  %v120 = vrot.slane %v119, 4
  %v121 = vadd.f32 %v119, %v120
  %v122 = vrot.slane %v121, 2
  %v123 = vadd.f32 %v121, %v122
  %v124 = vrot.slane %v123, 1
  %v125 = vadd.f32 %v123, %v124
  %v126 = vmul.f32 %v111, %v111
  %v127 = vmul.f32 %v112, %v112
  %v128 = vmul.f32 %v113, %v113
  %v129 = vmul.f32 %v114, %v114
  %v130 = vadd.f32 %v126, %v127
  %v131 = vadd.f32 %v130, %v128
  %v132 = vadd.f32 %v131, %v129
  %v133 = vrot.slane %v132, 4
  %v134 = vadd.f32 %v132, %v133
  %v135 = vrot.slane %v134, 2
  %v136 = vadd.f32 %v134, %v135
  %v137 = vrot.slane %v136, 1
  %v138 = vadd.f32 %v136, %v137
  %139 = vrot.lane.b32.xlu0 %v125, 8
  %v140 = vpop.permute.xlu0 %139
  %v141 = vadd.f32 %v125, %v140
  %142 = vrot.lane.b32.xlu0 %v138, 8
  %v143 = vpop.permute.xlu0 %142
  %v144 = vadd.f32 %v138, %v143
  %145 = vrot.lane.b32.xlu0 %v141, 16
  %v146 = vpop.permute.xlu0 %145
  %v147 = vadd.f32 %v141, %v146
  %148 = vrot.lane.b32.xlu0 %v144, 16
  %v149 = vpop.permute.xlu0 %148
  %v150 = vadd.f32 %v144, %v149
  %151 = vrot.lane.b32.xlu0 %v147, 32
  %v152 = vpop.permute.xlu0 %151
  %v153 = vadd.f32 %v147, %v152
  %154 = vrot.lane.b32.xlu0 %v150, 32
  %v155 = vpop.permute.xlu0 %154
  %v156 = vadd.f32 %v150, %v155
  %157 = vrot.lane.b32.xlu0 %v153, 64
  %v158 = vpop.permute.xlu0 %157
  %v159 = vadd.f32 %v153, %v158
  %160 = vrot.lane.b32.xlu0 %v156, 64
  %v161 = vpop.permute.xlu0 %160
  %v162 = vadd.f32 %v156, %v161
  %v163 = vmul.f32 %v159, 0.001953125
  %v164 = vmul.f32 %v162, 0.001953125
  %v165 = vmul.f32 %v163, %v163
  %v166 = vsub.f32 %v164, %v165
  %v167 = vadd.f32 %v166, 1e-05
  %v168 = vrsqrt.pop %v167
  %v169 = vmul.f32 %v168, %v167
  %v170 = vmul.f32 %v169, %v168
  %v171 = vmul.f32 0.5, %v170
  %v172 = vsub.f32 1.5, %v171
  %v173 = vmul.f32 %v168, %v172
  %vm174 = vweird.f32 %v167
  %vm175 = vweird.f32 %v168
  %vm176 = vmor %vm174, %vm175
  %v177 = vsel %vm176, %v168, %v173
  %v178 = vmul.f32 %v115, %v177
  %v180 = vperm.slane %v178, 0
  %v182 = vmul.f32 %v111, %v180
  %v183 = vmul.f32 %v112, %v180
  %v184 = vmul.f32 %v113, %v180
  %v185 = vmul.f32 %v114, %v180
  %v186 = vmul.f32 %v163, %v178
  %v187 = vsub.f32 %v116, %v186
  %v189 = vperm.slane %v187, 0
  %v191 = vadd.f32 %v182, %v189
  %v192 = vadd.f32 %v183, %v189
  %v193 = vadd.f32 %v184, %v189
  %v194 = vadd.f32 %v185, %v189
  %v195 = vlaneseq
  %v196 = vshrl.u32 %v195, 7
  %v197 = vadd.s32 %v196, 8
  %v198 = vadd.s32 %v196, 16
  %v199 = vadd.s32 %v196, 24
  %vm200 = vcmp.lt.s32.totalorder %v196, 0
  %v201 = vsub.s32 0, %v196
  %v202 = vsel %vm200, %v201, %v196
  %v203 = vshrl.u32 %v202, 4
  %v204 = vand.u32 %v202, 15
  %v205 = vsub.s32 0, %v204
  %v206 = vsel %vm200, %v205, %v204
  %vm207 = vcmp.lt.s32.totalorder %v197, 0
  %v208 = vsub.s32 0, %v197
  %v209 = vsel %vm207, %v208, %v197
  %v210 = vshrl.u32 %v209, 4
  %v211 = vand.u32 %v209, 15
  %v212 = vsub.s32 0, %v211
  %v213 = vsel %vm207, %v212, %v211
  %vm214 = vcmp.lt.s32.totalorder %v198, 0
  %v215 = vsub.s32 0, %v198
  %v216 = vsel %vm214, %v215, %v198
  %v217 = vshrl.u32 %v216, 4
  %v218 = vand.u32 %v216, 15
  %v219 = vsub.s32 0, %v218
  %v220 = vsel %vm214, %v219, %v218
  %vm221 = vcmp.lt.s32.totalorder %v199, 0
  %v222 = vsub.s32 0, %v199
  %v223 = vsel %vm221, %v222, %v199
  %v224 = vshrl.u32 %v223, 4
  %v225 = vand.u32 %v223, 15
  %v226 = vsub.s32 0, %v225
  %v227 = vsel %vm221, %v226, %v225
  %vm228 = vcmp.ne.s32.totalorder %v206, 0
  %vm229 = vcmp.ne.s32.totalorder %v213, 0
  %vm230 = vcmp.ne.s32.totalorder %v220, 0
  %vm231 = vcmp.ne.s32.totalorder %v227, 0
  %vm232 = vcmp.lt.s32.totalorder %v206, 0
  %vm233 = vcmp.lt.s32.totalorder %v213, 0
  %vm234 = vcmp.lt.s32.totalorder %v220, 0
  %vm235 = vcmp.lt.s32.totalorder %v227, 0
  %vm236 = vmand %vm232, %vm228
  %vm237 = vmand %vm233, %vm229
  %vm238 = vmand %vm234, %vm230
  %vm239 = vmand %vm235, %vm231
  %v240 = vadd.s32 %v206, 16
  %v241 = vadd.s32 %v213, 16
  %v242 = vadd.s32 %v220, 16
  %v243 = vadd.s32 %v227, 16
  %v244 = vsel %vm236, %v240, %v206
  %v245 = vsel %vm237, %v241, %v213
  %v246 = vsel %vm238, %v242, %v220
  %v247 = vsel %vm239, %v243, %v227
  %vm248 = vcmp.ne.s32.totalorder %v244, 0
  %vm249 = vcmp.ne.s32.totalorder %v245, 0
  %vm250 = vcmp.ne.s32.totalorder %v246, 0
  %vm251 = vcmp.ne.s32.totalorder %v247, 0
  %v252 = vsel %vm248, 1, 0
  %v253 = vsel %vm249, 1, 0
  %v254 = vsel %vm250, 1, 0
  %v255 = vsel %vm251, 1, 0
  %v256 = vcvt.s32.f32 %v252
  %v257 = vcvt.s32.f32 %v253
  %v258 = vcvt.s32.f32 %v254
  %v259 = vcvt.s32.f32 %v255
  %vm260 = vcmp.ne.s32.totalorder %v244, 15
  %vm261 = vcmp.ne.s32.totalorder %v245, 15
  %vm262 = vcmp.ne.s32.totalorder %v246, 15
  %vm263 = vcmp.ne.s32.totalorder %v247, 15
  %v264 = vsel %vm260, 1, 0
  %v265 = vsel %vm261, 1, 0
  %v266 = vsel %vm262, 1, 0
  %v267 = vsel %vm263, 1, 0
  %v268 = vcvt.s32.f32 %v264
  %v269 = vcvt.s32.f32 %v265
  %v270 = vcvt.s32.f32 %v266
  %v271 = vcvt.s32.f32 %v267
  %v272 = vrot.slane %v191, 7
  %v273 = vrot.slane %v192, 7
  %v274 = vrot.slane %v193, 7
  %v275 = vrot.slane %v194, 7
  %vm276 = vcmp.lt.s32.totalorder %v196, 1
  %v277 = vsel %vm276, %v274, %v275
  %v278 = vsel %vm276, %v273, %v274
  %v279 = vsel %vm276, %v272, %v273
  %v280 = vsel %vm276, %v275, %v272
  %v281 = vmul.f32 %v280, %v256
  %v282 = vmul.f32 %v279, %v257
  %v283 = vmul.f32 %v278, %v258
  %v284 = vmul.f32 %v277, %v259
  %v285 = vrot.slane %v191, 1
  %v286 = vrot.slane %v192, 1
  %v287 = vrot.slane %v193, 1
  %v288 = vrot.slane %v194, 1
  %vm289 = vcmp.lt.s32.totalorder %v196, 7
  %v290 = vsel %vm289, %v287, %v288
  %v291 = vsel %vm289, %v286, %v287
  %v292 = vsel %vm289, %v285, %v286
  %v293 = vsel %vm289, %v288, %v285
  %v294 = vmul.f32 %v292, %v268
  %v295 = vmul.f32 %v291, %v269
  %v296 = vmul.f32 %v290, %v270
  %v297 = vmul.f32 %v293, %v271
  %v298 = vpack.c.bf16 %v282, %v281
  %v299 = vpack.c.bf16 %v192, %v191
  %v300 = vpack.c.bf16 %v295, %v294
  %v301 = vpack.c.bf16 %v284, %v283
  %v302 = vpack.c.bf16 %v194, %v193
  %v303 = vpack.c.bf16 %v297, %v296
  %v304 = vld [vmem:[%s2] sm:$0xf]
  %v305 = vld [vmem:[%s2 + $0x4] sm:$0xf]
  %v306 = vld [vmem:[%s2 + $0x8] sm:$0xf]
  %v307 = vld [vmem:[%s2 + $0xc] sm:$0xf]
  %v308 = vld [vmem:[%s2 + $0x10] sm:$0xf]
  %v309 = vld [vmem:[%s2 + $0x14] sm:$0xf]
  %v310 = vld [vmem:[%s2 + $0x18] sm:$0xf]
  %v311 = vld [vmem:[%s2 + $0x1c] sm:$0xf]
  %v312 = vld [vmem:[%s2 + $0x20] sm:$0xf]
  %v313 = vld [vmem:[%s2 + $0x24] sm:$0xf]
  %v314 = vld [vmem:[%s2 + $0x28] sm:$0xf]
  %v315 = vld [vmem:[%s2 + $0x2c] sm:$0xf]
  %v316 = vld [vmem:[%s2 + $0x30] sm:$0xf]
  %v317 = vld [vmem:[%s2 + $0x34] sm:$0xf]
  %v318 = vld [vmem:[%s2 + $0x38] sm:$0xf]
  %v319 = vld [vmem:[%s2 + $0x3c] sm:$0xf]
  %v320 = vld [vmem:[%s2 + $0x40] sm:$0xf]
  %v321 = vld [vmem:[%s2 + $0x44] sm:$0xf]
  %v322 = vld [vmem:[%s2 + $0x48] sm:$0xf]
  %v323 = vld [vmem:[%s2 + $0x4c] sm:$0xf]
  %v324 = vld [vmem:[%s2 + $0x50] sm:$0xf]
  %v325 = vld [vmem:[%s2 + $0x54] sm:$0xf]
  %v326 = vld [vmem:[%s2 + $0x58] sm:$0xf]
  %v327 = vld [vmem:[%s2 + $0x5c] sm:$0xf]
  %v328 = vld [vmem:[%s2 + $0x60] sm:$0xf]
  %v329 = vld [vmem:[%s2 + $0x64] sm:$0xf]
  %v330 = vld [vmem:[%s2 + $0x68] sm:$0xf]
  %v331 = vld [vmem:[%s2 + $0x6c] sm:$0xf]
  %v332 = vld [vmem:[%s2 + $0x70] sm:$0xf]
  %v333 = vld [vmem:[%s2 + $0x74] sm:$0xf]
  %v334 = vld [vmem:[%s2 + $0x78] sm:$0xf]
  %v335 = vld [vmem:[%s2 + $0x7c] sm:$0xf]
  %v336 = vld [vmem:[%s2 + $0x80] sm:$0xf]
  %v337 = vld [vmem:[%s2 + $0x84] sm:$0xf]
  %v338 = vld [vmem:[%s2 + $0x88] sm:$0xf]
  %v339 = vld [vmem:[%s2 + $0x8c] sm:$0xf]
  %v340 = vld [vmem:[%s2 + $0x90] sm:$0xf]
  %v341 = vld [vmem:[%s2 + $0x94] sm:$0xf]
  %v342 = vld [vmem:[%s2 + $0x98] sm:$0xf]
  %v343 = vld [vmem:[%s2 + $0x9c] sm:$0xf]
  %v344 = vld [vmem:[%s2 + $0xa0] sm:$0xf]
  %v345 = vld [vmem:[%s2 + $0xa4] sm:$0xf]
  %v346 = vld [vmem:[%s2 + $0xa8] sm:$0xf]
  %v347 = vld [vmem:[%s2 + $0xac] sm:$0xf]
  %v348 = vld [vmem:[%s2 + $0xb0] sm:$0xf]
  %v349 = vld [vmem:[%s2 + $0xb4] sm:$0xf]
  %v350 = vld [vmem:[%s2 + $0xb8] sm:$0xf]
  %v351 = vld [vmem:[%s2 + $0xbc] sm:$0xf]
  %v400 = vunpack.c.l.b16 %v304
  %v401 = vunpack.c.l.b16 %v305
  %v402 = vunpack.c.l.b16 %v306
  %v403 = vunpack.c.l.b16 %v307
  %v404 = vunpack.c.l.b16 %v308
  %v405 = vunpack.c.l.b16 %v309
  %v406 = vunpack.c.l.b16 %v310
  %v407 = vunpack.c.l.b16 %v311
  %v408 = vunpack.c.l.b16 %v312
  %v409 = vunpack.c.l.b16 %v313
  %v410 = vunpack.c.l.b16 %v314
  %v411 = vunpack.c.l.b16 %v315
  %v412 = vunpack.c.l.b16 %v316
  %v413 = vunpack.c.l.b16 %v317
  %v414 = vunpack.c.l.b16 %v318
  %v415 = vunpack.c.l.b16 %v319
  %v416 = vunpack.c.l.b16 %v320
  %v417 = vunpack.c.l.b16 %v321
  %v418 = vunpack.c.l.b16 %v322
  %v419 = vunpack.c.l.b16 %v323
  %v420 = vunpack.c.l.b16 %v324
  %v421 = vunpack.c.l.b16 %v325
  %v422 = vunpack.c.l.b16 %v326
  %v423 = vunpack.c.l.b16 %v327
  %v424 = vunpack.c.l.b16 %v328
  %v425 = vunpack.c.l.b16 %v329
  %v426 = vunpack.c.l.b16 %v330
  %v427 = vunpack.c.l.b16 %v331
  %v428 = vunpack.c.l.b16 %v332
  %v429 = vunpack.c.l.b16 %v333
  %v430 = vunpack.c.l.b16 %v334
  %v431 = vunpack.c.l.b16 %v335
  %v432 = vunpack.c.l.b16 %v336
  %v433 = vunpack.c.l.b16 %v337
  %v434 = vunpack.c.l.b16 %v338
  %v435 = vunpack.c.l.b16 %v339
  %v436 = vunpack.c.l.b16 %v340
  %v437 = vunpack.c.l.b16 %v341
  %v438 = vunpack.c.l.b16 %v342
  %v439 = vunpack.c.l.b16 %v343
  %v440 = vunpack.c.l.b16 %v344
  %v441 = vunpack.c.l.b16 %v345
  %v442 = vunpack.c.l.b16 %v346
  %v443 = vunpack.c.l.b16 %v347
  %v444 = vunpack.c.l.b16 %v348
  %v445 = vunpack.c.l.b16 %v349
  %v446 = vunpack.c.l.b16 %v350
  %v447 = vunpack.c.l.b16 %v351
  %v448 = vpack.c.b16 %v401, %v400
  %v449 = vpack.c.b16 %v403, %v402
  %v450 = vpack.c.b16 %v405, %v404
  %v451 = vpack.c.b16 %v407, %v406
  %v452 = vpack.c.b16 %v409, %v408
  %v453 = vpack.c.b16 %v411, %v410
  %v454 = vpack.c.b16 %v413, %v412
  %v455 = vpack.c.b16 %v415, %v414
  %v456 = vpack.c.b16 %v417, %v416
  %v457 = vpack.c.b16 %v419, %v418
  %v458 = vpack.c.b16 %v421, %v420
  %v459 = vpack.c.b16 %v423, %v422
  %v460 = vpack.c.b16 %v425, %v424
  %v461 = vpack.c.b16 %v427, %v426
  %v462 = vpack.c.b16 %v429, %v428
  %v463 = vpack.c.b16 %v431, %v430
  %v464 = vpack.c.b16 %v433, %v432
  %v465 = vpack.c.b16 %v435, %v434
  %v466 = vpack.c.b16 %v437, %v436
  %v467 = vpack.c.b16 %v439, %v438
  %v468 = vpack.c.b16 %v441, %v440
  %v469 = vpack.c.b16 %v443, %v442
  %v470 = vpack.c.b16 %v445, %v444
  %v471 = vpack.c.b16 %v447, %v446
  %496 = vmatpush.bf16.msra.mxu0 %v455
  %497 = vmatpush.bf16.msra.mxu0 %v454
  %498 = vmatpush.bf16.msra.mxu0 %v453
  %499 = vmatpush.bf16.msra.mxu0 %v452
  %500 = vmatpush.bf16.msra.mxu0 %v451
  %501 = vmatpush.bf16.msra.mxu0 %v450
  %502 = vmatpush.bf16.msra.mxu0 %v449
  %503 = vmatpush.bf16.msra.mxu0 %v448
  %504 = vmatmul.bf16.gmra.mxu0 %v298
  %v505 = vpop.f32.mrf.mxu0
  %v506 = vadd.f32 0.0, %v505
  %v507 = vpop.f32.mrf.mxu0
  %v508 = vadd.f32 0.0, %v507
  %509 = vmatmul.bf16.gmra.mxu0 %v301
  %v510 = vpop.f32.mrf.mxu0
  %v511 = vadd.f32 0.0, %v510
  %v512 = vpop.f32.mrf.mxu0
  %v513 = vadd.f32 0.0, %v512
  %514 = vdwg.mxu0
  %515 = vmatpush.bf16.msra.mxu0 %v463
  %516 = vmatpush.bf16.msra.mxu0 %v462
  %517 = vmatpush.bf16.msra.mxu0 %v461
  %518 = vmatpush.bf16.msra.mxu0 %v460
  %519 = vmatpush.bf16.msra.mxu0 %v459
  %520 = vmatpush.bf16.msra.mxu0 %v458
  %521 = vmatpush.bf16.msra.mxu0 %v457
  %522 = vmatpush.bf16.msra.mxu0 %v456
  %523 = vmatmul.bf16.gmra.mxu0 %v299
  %v524 = vpop.f32.mrf.mxu0
  %v525 = vadd.f32 %v506, %v524
  %v526 = vpop.f32.mrf.mxu0
  %v527 = vadd.f32 %v508, %v526
  %528 = vmatmul.bf16.gmra.mxu0 %v302
  %v529 = vpop.f32.mrf.mxu0
  %v530 = vadd.f32 %v511, %v529
  %v531 = vpop.f32.mrf.mxu0
  %v532 = vadd.f32 %v513, %v531
  %533 = vdwg.mxu0
  %534 = vmatpush.bf16.msra.mxu0 %v471
  %535 = vmatpush.bf16.msra.mxu0 %v470
  %536 = vmatpush.bf16.msra.mxu0 %v469
  %537 = vmatpush.bf16.msra.mxu0 %v468
  %538 = vmatpush.bf16.msra.mxu0 %v467
  %539 = vmatpush.bf16.msra.mxu0 %v466
  %540 = vmatpush.bf16.msra.mxu0 %v465
  %541 = vmatpush.bf16.msra.mxu0 %v464
  %542 = vmatmul.bf16.gmra.mxu0 %v300
  %v543 = vpop.f32.mrf.mxu0
  %v544 = vadd.f32 %v525, %v543
  %v545 = vpop.f32.mrf.mxu0
  %v546 = vadd.f32 %v527, %v545
  %547 = vmatmul.bf16.gmra.mxu0 %v303
  %v548 = vpop.f32.mrf.mxu0
  %v549 = vadd.f32 %v530, %v548
  %v550 = vpop.f32.mrf.mxu0
  %v551 = vadd.f32 %v532, %v550
  %552 = vdwg.mxu0
  %vm553 = vcmp.ge.f32.partialorder %v544, 0.0
  %vm554 = vcmp.ge.f32.partialorder %v546, 0.0
  %vm555 = vcmp.ge.f32.partialorder %v549, 0.0
  %vm556 = vcmp.ge.f32.partialorder %v551, 0.0
  %v557 = vmul.f32 %v544, 0.2
  %v558 = vmul.f32 %v546, 0.2
  %v559 = vmul.f32 %v549, 0.2
  %v560 = vmul.f32 %v551, 0.2
  %v561 = vsel %vm553, %v544, %v557
  %v562 = vsel %vm554, %v546, %v558
  %v563 = vsel %vm555, %v549, %v559
  %v564 = vsel %vm556, %v551, %v560
  %v565 = vld [vmem:[%s7] sm:$0x1]
  %v566 = vld [vmem:[%s8] sm:$0x1]
  %v567 = vadd.f32 %v561, %v562
  %v568 = vadd.f32 %v567, %v563
  %v569 = vadd.f32 %v568, %v564
  %v570 = vrot.slane %v569, 4
  %v571 = vadd.f32 %v569, %v570
  %v572 = vrot.slane %v571, 2
  %v573 = vadd.f32 %v571, %v572
  %v574 = vrot.slane %v573, 1
  %v575 = vadd.f32 %v573, %v574
  %v576 = vmul.f32 %v561, %v561
  %v577 = vmul.f32 %v562, %v562
  %v578 = vmul.f32 %v563, %v563
  %v579 = vmul.f32 %v564, %v564
  %v580 = vadd.f32 %v576, %v577
  %v581 = vadd.f32 %v580, %v578
  %v582 = vadd.f32 %v581, %v579
  %v583 = vrot.slane %v582, 4
  %v584 = vadd.f32 %v582, %v583
  %v585 = vrot.slane %v584, 2
  %v586 = vadd.f32 %v584, %v585
  %v587 = vrot.slane %v586, 1
  %v588 = vadd.f32 %v586, %v587
  %589 = vrot.lane.b32.xlu0 %v575, 8
  %v590 = vpop.permute.xlu0 %589
  %v591 = vadd.f32 %v575, %v590
  %592 = vrot.lane.b32.xlu0 %v588, 8
  %v593 = vpop.permute.xlu0 %592
  %v594 = vadd.f32 %v588, %v593
  %595 = vrot.lane.b32.xlu0 %v591, 16
  %v596 = vpop.permute.xlu0 %595
  %v597 = vadd.f32 %v591, %v596
  %598 = vrot.lane.b32.xlu0 %v594, 16
  %v599 = vpop.permute.xlu0 %598
  %v600 = vadd.f32 %v594, %v599
  %601 = vrot.lane.b32.xlu0 %v597, 32
  %v602 = vpop.permute.xlu0 %601
  %v603 = vadd.f32 %v597, %v602
  %604 = vrot.lane.b32.xlu0 %v600, 32
  %v605 = vpop.permute.xlu0 %604
  %v606 = vadd.f32 %v600, %v605
  %607 = vrot.lane.b32.xlu0 %v603, 64
  %v608 = vpop.permute.xlu0 %607
  %v609 = vadd.f32 %v603, %v608
  %610 = vrot.lane.b32.xlu0 %v606, 64
  %v611 = vpop.permute.xlu0 %610
  %v612 = vadd.f32 %v606, %v611
  %v613 = vmul.f32 %v609, 0.001953125
  %v614 = vmul.f32 %v612, 0.001953125
  %v615 = vmul.f32 %v613, %v613
  %v616 = vsub.f32 %v614, %v615
  %v617 = vadd.f32 %v616, 1e-05
  %v618 = vrsqrt.pop %v617
  %v619 = vmul.f32 %v618, %v617
  %v620 = vmul.f32 %v619, %v618
  %v621 = vmul.f32 0.5, %v620
  %v622 = vsub.f32 1.5, %v621
  %v623 = vmul.f32 %v618, %v622
  %vm624 = vweird.f32 %v617
  %vm625 = vweird.f32 %v618
  %vm626 = vmor %vm624, %vm625
  %v627 = vsel %vm626, %v618, %v623
  %v628 = vmul.f32 %v565, %v627
  %v630 = vperm.slane %v628, 0
  %v632 = vmul.f32 %v561, %v630
  %v633 = vmul.f32 %v562, %v630
  %v634 = vmul.f32 %v563, %v630
  %v635 = vmul.f32 %v564, %v630
  %v636 = vmul.f32 %v613, %v628
  %v637 = vsub.f32 %v566, %v636
  %v639 = vperm.slane %v637, 0
  %v641 = vadd.f32 %v632, %v639
  %v642 = vadd.f32 %v633, %v639
  %v643 = vadd.f32 %v634, %v639
  %v644 = vadd.f32 %v635, %v639
  %v645 = vpack.c.bf16 %v642, %v641
  %v646 = vpack.c.bf16 %v644, %v643
  %v647 = vld [vmem:[%s3] sm:$0xf]
  %v648 = vld [vmem:[%s3 + $0x4] sm:$0xf]
  %v649 = vld [vmem:[%s3 + $0x8] sm:$0xf]
  %v650 = vld [vmem:[%s3 + $0xc] sm:$0xf]
  %v651 = vld [vmem:[%s3 + $0x10] sm:$0xf]
  %v652 = vld [vmem:[%s3 + $0x14] sm:$0xf]
  %v653 = vld [vmem:[%s3 + $0x18] sm:$0xf]
  %v654 = vld [vmem:[%s3 + $0x1c] sm:$0xf]
  %v655 = vld [vmem:[%s3 + $0x20] sm:$0xf]
  %v656 = vld [vmem:[%s3 + $0x24] sm:$0xf]
  %v657 = vld [vmem:[%s3 + $0x28] sm:$0xf]
  %v658 = vld [vmem:[%s3 + $0x2c] sm:$0xf]
  %v659 = vld [vmem:[%s3 + $0x30] sm:$0xf]
  %v660 = vld [vmem:[%s3 + $0x34] sm:$0xf]
  %v661 = vld [vmem:[%s3 + $0x38] sm:$0xf]
  %v662 = vld [vmem:[%s3 + $0x3c] sm:$0xf]
  %v679 = vunpack.c.l.b16 %v647
  %v680 = vunpack.c.l.b16 %v648
  %v681 = vunpack.c.l.b16 %v649
  %v682 = vunpack.c.l.b16 %v650
  %v683 = vunpack.c.l.b16 %v651
  %v684 = vunpack.c.l.b16 %v652
  %v685 = vunpack.c.l.b16 %v653
  %v686 = vunpack.c.l.b16 %v654
  %v687 = vunpack.c.l.b16 %v655
  %v688 = vunpack.c.l.b16 %v656
  %v689 = vunpack.c.l.b16 %v657
  %v690 = vunpack.c.l.b16 %v658
  %v691 = vunpack.c.l.b16 %v659
  %v692 = vunpack.c.l.b16 %v660
  %v693 = vunpack.c.l.b16 %v661
  %v694 = vunpack.c.l.b16 %v662
  %v695 = vpack.c.b16 %v680, %v679
  %v696 = vpack.c.b16 %v682, %v681
  %v697 = vpack.c.b16 %v684, %v683
  %v698 = vpack.c.b16 %v686, %v685
  %v699 = vpack.c.b16 %v688, %v687
  %v700 = vpack.c.b16 %v690, %v689
  %v701 = vpack.c.b16 %v692, %v691
  %v702 = vpack.c.b16 %v694, %v693
  %711 = vmatpush.bf16.msra.mxu0 %v702
  %712 = vmatpush.bf16.msra.mxu0 %v701
  %713 = vmatpush.bf16.msra.mxu0 %v700
  %714 = vmatpush.bf16.msra.mxu0 %v699
  %715 = vmatpush.bf16.msra.mxu0 %v698
  %716 = vmatpush.bf16.msra.mxu0 %v697
  %717 = vmatpush.bf16.msra.mxu0 %v696
  %718 = vmatpush.bf16.msra.mxu0 %v695
  %719 = vmatmul.bf16.gmra.mxu0 %v645
  %v720 = vpop.f32.mrf.mxu0
  %v721 = vadd.f32 0.0, %v720
  %v722 = vpop.f32.mrf.mxu0
  %v723 = vadd.f32 0.0, %v722
  %724 = vmatmul.bf16.gmra.mxu0 %v646
  %v725 = vpop.f32.mrf.mxu0
  %v726 = vadd.f32 0.0, %v725
  %v727 = vpop.f32.mrf.mxu0
  %v728 = vadd.f32 0.0, %v727
  %729 = vdwg.mxu0
  %vm730 = vcmp.ge.f32.partialorder %v721, 0.0
  %vm731 = vcmp.ge.f32.partialorder %v723, 0.0
  %vm732 = vcmp.ge.f32.partialorder %v726, 0.0
  %vm733 = vcmp.ge.f32.partialorder %v728, 0.0
  %v734 = vmul.f32 %v721, 0.2
  %v735 = vmul.f32 %v723, 0.2
  %v736 = vmul.f32 %v726, 0.2
  %v737 = vmul.f32 %v728, 0.2
  %v738 = vsel %vm730, %v721, %v734
  %v739 = vsel %vm731, %v723, %v735
  %v740 = vsel %vm732, %v726, %v736
  %v741 = vsel %vm733, %v728, %v737
  %v742 = vld [vmem:[%s4] sm:$0xff]
  %v743 = vld [vmem:[%s4 + $0x8] sm:$0xff]
  %v744 = vld [vmem:[%s4 + $0x10] sm:$0xff]
  %v745 = vld [vmem:[%s4 + $0x18] sm:$0xff]
  %v746 = vld [vmem:[%s4 + $0x20] sm:$0xff]
  %v747 = vld [vmem:[%s4 + $0x28] sm:$0xff]
  %v748 = vld [vmem:[%s4 + $0x30] sm:$0xff]
  %v749 = vld [vmem:[%s4 + $0x38] sm:$0xff]
  %v750 = vld [vmem:[%s9] sm:$0x1]
  %v751 = vld [vmem:[%s10] sm:$0x1]
  %v752 = vsel %vm77, %v738, 0.0
  %v753 = vsel %vm77, %v739, 0.0
  %v754 = vadd.f32 %v752, %v753
  %v755 = vsel %vm77, %v740, 0.0
  %v756 = vadd.f32 %v754, %v755
  %v757 = vsel %vm77, %v741, 0.0
  %v758 = vadd.f32 %v756, %v757
  %v759 = vrot.slane %v758, 4
  %v760 = vadd.f32 %v758, %v759
  %v761 = vrot.slane %v760, 2
  %v762 = vadd.f32 %v760, %v761
  %v763 = vrot.slane %v762, 1
  %v764 = vadd.f32 %v762, %v763
  %v765 = vmul.f32 %v738, %v738
  %v766 = vmul.f32 %v739, %v739
  %v767 = vmul.f32 %v740, %v740
  %v768 = vmul.f32 %v741, %v741
  %v769 = vsel %vm77, %v765, 0.0
  %v770 = vsel %vm77, %v766, 0.0
  %v771 = vadd.f32 %v769, %v770
  %v772 = vsel %vm77, %v767, 0.0
  %v773 = vadd.f32 %v771, %v772
  %v774 = vsel %vm77, %v768, 0.0
  %v775 = vadd.f32 %v773, %v774
  %v776 = vrot.slane %v775, 4
  %v777 = vadd.f32 %v775, %v776
  %v778 = vrot.slane %v777, 2
  %v779 = vadd.f32 %v777, %v778
  %v780 = vrot.slane %v779, 1
  %v781 = vadd.f32 %v779, %v780
  %v783 = vsel %vm77, %v764, 0
  %785 = vmatpush.msra.mxu0 0.0
  %786 = vmatpush.msra.mxu0 0.0
  %787 = vmatpush.msra.mxu0 0.0
  %788 = vmatpush.msra.mxu0 0.0
  %789 = vmatpush.msra.mxu0 0.0
  %790 = vmatpush.msra.mxu0 0.0
  %791 = vmatpush.msra.mxu0 0.0
  %792 = vmatpush.msra.mxu0 0.0
  %v793 = vand.u32 %v749, 4294901760
  %794 = vmatpush.msra.mxu0 %v793
  %v795 = vand.u32 %v748, 4294901760
  %796 = vmatpush.msra.mxu0 %v795
  %v797 = vand.u32 %v747, 4294901760
  %798 = vmatpush.msra.mxu0 %v797
  %v799 = vand.u32 %v746, 4294901760
  %800 = vmatpush.msra.mxu0 %v799
  %v801 = vand.u32 %v745, 4294901760
  %802 = vmatpush.msra.mxu0 %v801
  %v803 = vand.u32 %v744, 4294901760
  %804 = vmatpush.msra.mxu0 %v803
  %v805 = vand.u32 %v743, 4294901760
  %806 = vmatpush.msra.mxu0 %v805
  %v807 = vand.u32 %v742, 4294901760
  %808 = vmatpush.msra.mxu0 %v807
  %v809 = vand.u32 %v783, 4294901760
  %v810 = vsub.f32 %v783, %v809
  %v811 = vand.u32 %v810, 4294901760
  %v812 = vsub.f32 %v810, %v811
  %v813 = vand.u32 %v812, 4294901760
  %814 = vmatmul.f32.gmra.mxu0 %v813
  %v815 = vpop.f32.mrf.mxu0
  %v816 = vadd.f32 0.0, %v815
  %817 = vdwg.mxu0
  %818 = vmatpush.msra.mxu0 0.0
  %819 = vmatpush.msra.mxu0 0.0
  %820 = vmatpush.msra.mxu0 0.0
  %821 = vmatpush.msra.mxu0 0.0
  %822 = vmatpush.msra.mxu0 0.0
  %823 = vmatpush.msra.mxu0 0.0
  %824 = vmatpush.msra.mxu0 0.0
  %825 = vmatpush.msra.mxu0 0.0
  %v826 = vand.u32 %v749, 4294901760
  %v827 = vsub.f32 %v749, %v826
  %v828 = vand.u32 %v827, 4294901760
  %v829 = vsub.f32 %v827, %v828
  %v830 = vand.u32 %v829, 4294901760
  %831 = vmatpush.msra.mxu0 %v830
  %v832 = vand.u32 %v748, 4294901760
  %v833 = vsub.f32 %v748, %v832
  %v834 = vand.u32 %v833, 4294901760
  %v835 = vsub.f32 %v833, %v834
  %v836 = vand.u32 %v835, 4294901760
  %837 = vmatpush.msra.mxu0 %v836
  %v838 = vand.u32 %v747, 4294901760
  %v839 = vsub.f32 %v747, %v838
  %v840 = vand.u32 %v839, 4294901760
  %v841 = vsub.f32 %v839, %v840
  %v842 = vand.u32 %v841, 4294901760
  %843 = vmatpush.msra.mxu0 %v842
  %v844 = vand.u32 %v746, 4294901760
  %v845 = vsub.f32 %v746, %v844
  %v846 = vand.u32 %v845, 4294901760
  %v847 = vsub.f32 %v845, %v846
  %v848 = vand.u32 %v847, 4294901760
  %849 = vmatpush.msra.mxu0 %v848
  %v850 = vand.u32 %v745, 4294901760
  %v851 = vsub.f32 %v745, %v850
  %v852 = vand.u32 %v851, 4294901760
  %v853 = vsub.f32 %v851, %v852
  %v854 = vand.u32 %v853, 4294901760
  %855 = vmatpush.msra.mxu0 %v854
  %v856 = vand.u32 %v744, 4294901760
  %v857 = vsub.f32 %v744, %v856
  %v858 = vand.u32 %v857, 4294901760
  %v859 = vsub.f32 %v857, %v858
  %v860 = vand.u32 %v859, 4294901760
  %861 = vmatpush.msra.mxu0 %v860
  %v862 = vand.u32 %v743, 4294901760
  %v863 = vsub.f32 %v743, %v862
  %v864 = vand.u32 %v863, 4294901760
  %v865 = vsub.f32 %v863, %v864
  %v866 = vand.u32 %v865, 4294901760
  %867 = vmatpush.msra.mxu0 %v866
  %v868 = vand.u32 %v742, 4294901760
  %v869 = vsub.f32 %v742, %v868
  %v870 = vand.u32 %v869, 4294901760
  %v871 = vsub.f32 %v869, %v870
  %v872 = vand.u32 %v871, 4294901760
  %873 = vmatpush.msra.mxu0 %v872
  %v874 = vand.u32 %v783, 4294901760
  %875 = vmatmul.f32.gmra.mxu0 %v874
  %v876 = vpop.f32.mrf.mxu0
  %v877 = vadd.f32 %v816, %v876
  %878 = vdwg.mxu0
  %879 = vmatpush.msra.mxu0 0.0
  %880 = vmatpush.msra.mxu0 0.0
  %881 = vmatpush.msra.mxu0 0.0
  %882 = vmatpush.msra.mxu0 0.0
  %883 = vmatpush.msra.mxu0 0.0
  %884 = vmatpush.msra.mxu0 0.0
  %885 = vmatpush.msra.mxu0 0.0
  %886 = vmatpush.msra.mxu0 0.0
  %v887 = vand.u32 %v749, 4294901760
  %v888 = vsub.f32 %v749, %v887
  %889 = vmatpush.msra.mxu0 %v888
  %v890 = vand.u32 %v748, 4294901760
  %v891 = vsub.f32 %v748, %v890
  %892 = vmatpush.msra.mxu0 %v891
  %v893 = vand.u32 %v747, 4294901760
  %v894 = vsub.f32 %v747, %v893
  %895 = vmatpush.msra.mxu0 %v894
  %v896 = vand.u32 %v746, 4294901760
  %v897 = vsub.f32 %v746, %v896
  %898 = vmatpush.msra.mxu0 %v897
  %v899 = vand.u32 %v745, 4294901760
  %v900 = vsub.f32 %v745, %v899
  %901 = vmatpush.msra.mxu0 %v900
  %v902 = vand.u32 %v744, 4294901760
  %v903 = vsub.f32 %v744, %v902
  %904 = vmatpush.msra.mxu0 %v903
  %v905 = vand.u32 %v743, 4294901760
  %v906 = vsub.f32 %v743, %v905
  %907 = vmatpush.msra.mxu0 %v906
  %v908 = vand.u32 %v742, 4294901760
  %v909 = vsub.f32 %v742, %v908
  %910 = vmatpush.msra.mxu0 %v909
  %v911 = vand.u32 %v783, 4294901760
  %v912 = vsub.f32 %v783, %v911
  %913 = vmatmul.f32.gmra.mxu0 %v912
  %v914 = vpop.f32.mrf.mxu0
  %v915 = vadd.f32 %v877, %v914
  %916 = vdwg.mxu0
  %917 = vmatpush.msra.mxu0 0.0
  %918 = vmatpush.msra.mxu0 0.0
  %919 = vmatpush.msra.mxu0 0.0
  %920 = vmatpush.msra.mxu0 0.0
  %921 = vmatpush.msra.mxu0 0.0
  %922 = vmatpush.msra.mxu0 0.0
  %923 = vmatpush.msra.mxu0 0.0
  %924 = vmatpush.msra.mxu0 0.0
  %v925 = vand.u32 %v749, 4294901760
  %926 = vmatpush.msra.mxu0 %v925
  %v927 = vand.u32 %v748, 4294901760
  %928 = vmatpush.msra.mxu0 %v927
  %v929 = vand.u32 %v747, 4294901760
  %930 = vmatpush.msra.mxu0 %v929
  %v931 = vand.u32 %v746, 4294901760
  %932 = vmatpush.msra.mxu0 %v931
  %v933 = vand.u32 %v745, 4294901760
  %934 = vmatpush.msra.mxu0 %v933
  %v935 = vand.u32 %v744, 4294901760
  %936 = vmatpush.msra.mxu0 %v935
  %v937 = vand.u32 %v743, 4294901760
  %938 = vmatpush.msra.mxu0 %v937
  %v939 = vand.u32 %v742, 4294901760
  %940 = vmatpush.msra.mxu0 %v939
  %v941 = vand.u32 %v783, 4294901760
  %v942 = vsub.f32 %v783, %v941
  %v943 = vand.u32 %v942, 4294901760
  %944 = vmatmul.f32.gmra.mxu0 %v943
  %v945 = vpop.f32.mrf.mxu0
  %v946 = vadd.f32 %v915, %v945
  %947 = vdwg.mxu0
  %948 = vmatpush.msra.mxu0 0.0
  %949 = vmatpush.msra.mxu0 0.0
  %950 = vmatpush.msra.mxu0 0.0
  %951 = vmatpush.msra.mxu0 0.0
  %952 = vmatpush.msra.mxu0 0.0
  %953 = vmatpush.msra.mxu0 0.0
  %954 = vmatpush.msra.mxu0 0.0
  %955 = vmatpush.msra.mxu0 0.0
  %v956 = vand.u32 %v749, 4294901760
  %v957 = vsub.f32 %v749, %v956
  %v958 = vand.u32 %v957, 4294901760
  %959 = vmatpush.msra.mxu0 %v958
  %v960 = vand.u32 %v748, 4294901760
  %v961 = vsub.f32 %v748, %v960
  %v962 = vand.u32 %v961, 4294901760
  %963 = vmatpush.msra.mxu0 %v962
  %v964 = vand.u32 %v747, 4294901760
  %v965 = vsub.f32 %v747, %v964
  %v966 = vand.u32 %v965, 4294901760
  %967 = vmatpush.msra.mxu0 %v966
  %v968 = vand.u32 %v746, 4294901760
  %v969 = vsub.f32 %v746, %v968
  %v970 = vand.u32 %v969, 4294901760
  %971 = vmatpush.msra.mxu0 %v970
  %v972 = vand.u32 %v745, 4294901760
  %v973 = vsub.f32 %v745, %v972
  %v974 = vand.u32 %v973, 4294901760
  %975 = vmatpush.msra.mxu0 %v974
  %v976 = vand.u32 %v744, 4294901760
  %v977 = vsub.f32 %v744, %v976
  %v978 = vand.u32 %v977, 4294901760
  %979 = vmatpush.msra.mxu0 %v978
  %v980 = vand.u32 %v743, 4294901760
  %v981 = vsub.f32 %v743, %v980
  %v982 = vand.u32 %v981, 4294901760
  %983 = vmatpush.msra.mxu0 %v982
  %v984 = vand.u32 %v742, 4294901760
  %v985 = vsub.f32 %v742, %v984
  %v986 = vand.u32 %v985, 4294901760
  %987 = vmatpush.msra.mxu0 %v986
  %v988 = vand.u32 %v783, 4294901760
  %989 = vmatmul.f32.gmra.mxu0 %v988
  %v990 = vpop.f32.mrf.mxu0
  %v991 = vadd.f32 %v946, %v990
  %992 = vdwg.mxu0
  %993 = vmatpush.msra.mxu0 0.0
  %994 = vmatpush.msra.mxu0 0.0
  %995 = vmatpush.msra.mxu0 0.0
  %996 = vmatpush.msra.mxu0 0.0
  %997 = vmatpush.msra.mxu0 0.0
  %998 = vmatpush.msra.mxu0 0.0
  %999 = vmatpush.msra.mxu0 0.0
  %1000 = vmatpush.msra.mxu0 0.0
  %v1001 = vand.u32 %v749, 4294901760
  %1002 = vmatpush.msra.mxu0 %v1001
  %v1003 = vand.u32 %v748, 4294901760
  %1004 = vmatpush.msra.mxu0 %v1003
  %v1005 = vand.u32 %v747, 4294901760
  %1006 = vmatpush.msra.mxu0 %v1005
  %v1007 = vand.u32 %v746, 4294901760
  %1008 = vmatpush.msra.mxu0 %v1007
  %v1009 = vand.u32 %v745, 4294901760
  %1010 = vmatpush.msra.mxu0 %v1009
  %v1011 = vand.u32 %v744, 4294901760
  %1012 = vmatpush.msra.mxu0 %v1011
  %v1013 = vand.u32 %v743, 4294901760
  %1014 = vmatpush.msra.mxu0 %v1013
  %v1015 = vand.u32 %v742, 4294901760
  %1016 = vmatpush.msra.mxu0 %v1015
  %v1017 = vand.u32 %v783, 4294901760
  %1018 = vmatmul.f32.gmra.mxu0 %v1017
  %v1019 = vpop.f32.mrf.mxu0
  %v1020 = vadd.f32 %v991, %v1019
  %1021 = vdwg.mxu0
  %v1023 = vsel %vm77, %v781, 0
  %1025 = vmatpush.msra.mxu0 0.0
  %1026 = vmatpush.msra.mxu0 0.0
  %1027 = vmatpush.msra.mxu0 0.0
  %1028 = vmatpush.msra.mxu0 0.0
  %1029 = vmatpush.msra.mxu0 0.0
  %1030 = vmatpush.msra.mxu0 0.0
  %1031 = vmatpush.msra.mxu0 0.0
  %1032 = vmatpush.msra.mxu0 0.0
  %v1033 = vand.u32 %v749, 4294901760
  %1034 = vmatpush.msra.mxu0 %v1033
  %v1035 = vand.u32 %v748, 4294901760
  %1036 = vmatpush.msra.mxu0 %v1035
  %v1037 = vand.u32 %v747, 4294901760
  %1038 = vmatpush.msra.mxu0 %v1037
  %v1039 = vand.u32 %v746, 4294901760
  %1040 = vmatpush.msra.mxu0 %v1039
  %v1041 = vand.u32 %v745, 4294901760
  %1042 = vmatpush.msra.mxu0 %v1041
  %v1043 = vand.u32 %v744, 4294901760
  %1044 = vmatpush.msra.mxu0 %v1043
  %v1045 = vand.u32 %v743, 4294901760
  %1046 = vmatpush.msra.mxu0 %v1045
  %v1047 = vand.u32 %v742, 4294901760
  %1048 = vmatpush.msra.mxu0 %v1047
  %v1049 = vand.u32 %v1023, 4294901760
  %v1050 = vsub.f32 %v1023, %v1049
  %v1051 = vand.u32 %v1050, 4294901760
  %v1052 = vsub.f32 %v1050, %v1051
  %v1053 = vand.u32 %v1052, 4294901760
  %1054 = vmatmul.f32.gmra.mxu0 %v1053
  %v1055 = vpop.f32.mrf.mxu0
  %v1056 = vadd.f32 0.0, %v1055
  %1057 = vdwg.mxu0
  %1058 = vmatpush.msra.mxu0 0.0
  %1059 = vmatpush.msra.mxu0 0.0
  %1060 = vmatpush.msra.mxu0 0.0
  %1061 = vmatpush.msra.mxu0 0.0
  %1062 = vmatpush.msra.mxu0 0.0
  %1063 = vmatpush.msra.mxu0 0.0
  %1064 = vmatpush.msra.mxu0 0.0
  %1065 = vmatpush.msra.mxu0 0.0
  %v1066 = vand.u32 %v749, 4294901760
  %v1067 = vsub.f32 %v749, %v1066
  %v1068 = vand.u32 %v1067, 4294901760
  %v1069 = vsub.f32 %v1067, %v1068
  %v1070 = vand.u32 %v1069, 4294901760
  %1071 = vmatpush.msra.mxu0 %v1070
  %v1072 = vand.u32 %v748, 4294901760
  %v1073 = vsub.f32 %v748, %v1072
  %v1074 = vand.u32 %v1073, 4294901760
  %v1075 = vsub.f32 %v1073, %v1074
  %v1076 = vand.u32 %v1075, 4294901760
  %1077 = vmatpush.msra.mxu0 %v1076
  %v1078 = vand.u32 %v747, 4294901760
  %v1079 = vsub.f32 %v747, %v1078
  %v1080 = vand.u32 %v1079, 4294901760
  %v1081 = vsub.f32 %v1079, %v1080
  %v1082 = vand.u32 %v1081, 4294901760
  %1083 = vmatpush.msra.mxu0 %v1082
  %v1084 = vand.u32 %v746, 4294901760
  %v1085 = vsub.f32 %v746, %v1084
  %v1086 = vand.u32 %v1085, 4294901760
  %v1087 = vsub.f32 %v1085, %v1086
  %v1088 = vand.u32 %v1087, 4294901760
  %1089 = vmatpush.msra.mxu0 %v1088
  %v1090 = vand.u32 %v745, 4294901760
  %v1091 = vsub.f32 %v745, %v1090
  %v1092 = vand.u32 %v1091, 4294901760
  %v1093 = vsub.f32 %v1091, %v1092
  %v1094 = vand.u32 %v1093, 4294901760
  %1095 = vmatpush.msra.mxu0 %v1094
  %v1096 = vand.u32 %v744, 4294901760
  %v1097 = vsub.f32 %v744, %v1096
  %v1098 = vand.u32 %v1097, 4294901760
  %v1099 = vsub.f32 %v1097, %v1098
  %v1100 = vand.u32 %v1099, 4294901760
  %1101 = vmatpush.msra.mxu0 %v1100
  %v1102 = vand.u32 %v743, 4294901760
  %v1103 = vsub.f32 %v743, %v1102
  %v1104 = vand.u32 %v1103, 4294901760
  %v1105 = vsub.f32 %v1103, %v1104
  %v1106 = vand.u32 %v1105, 4294901760
  %1107 = vmatpush.msra.mxu0 %v1106
  %v1108 = vand.u32 %v742, 4294901760
  %v1109 = vsub.f32 %v742, %v1108
  %v1110 = vand.u32 %v1109, 4294901760
  %v1111 = vsub.f32 %v1109, %v1110
  %v1112 = vand.u32 %v1111, 4294901760
  %1113 = vmatpush.msra.mxu0 %v1112
  %v1114 = vand.u32 %v1023, 4294901760
  %1115 = vmatmul.f32.gmra.mxu0 %v1114
  %v1116 = vpop.f32.mrf.mxu0
  %v1117 = vadd.f32 %v1056, %v1116
  %1118 = vdwg.mxu0
  %1119 = vmatpush.msra.mxu0 0.0
  %1120 = vmatpush.msra.mxu0 0.0
  %1121 = vmatpush.msra.mxu0 0.0
  %1122 = vmatpush.msra.mxu0 0.0
  %1123 = vmatpush.msra.mxu0 0.0
  %1124 = vmatpush.msra.mxu0 0.0
  %1125 = vmatpush.msra.mxu0 0.0
  %1126 = vmatpush.msra.mxu0 0.0
  %v1127 = vand.u32 %v749, 4294901760
  %v1128 = vsub.f32 %v749, %v1127
  %1129 = vmatpush.msra.mxu0 %v1128
  %v1130 = vand.u32 %v748, 4294901760
  %v1131 = vsub.f32 %v748, %v1130
  %1132 = vmatpush.msra.mxu0 %v1131
  %v1133 = vand.u32 %v747, 4294901760
  %v1134 = vsub.f32 %v747, %v1133
  %1135 = vmatpush.msra.mxu0 %v1134
  %v1136 = vand.u32 %v746, 4294901760
  %v1137 = vsub.f32 %v746, %v1136
  %1138 = vmatpush.msra.mxu0 %v1137
  %v1139 = vand.u32 %v745, 4294901760
  %v1140 = vsub.f32 %v745, %v1139
  %1141 = vmatpush.msra.mxu0 %v1140
  %v1142 = vand.u32 %v744, 4294901760
  %v1143 = vsub.f32 %v744, %v1142
  %1144 = vmatpush.msra.mxu0 %v1143
  %v1145 = vand.u32 %v743, 4294901760
  %v1146 = vsub.f32 %v743, %v1145
  %1147 = vmatpush.msra.mxu0 %v1146
  %v1148 = vand.u32 %v742, 4294901760
  %v1149 = vsub.f32 %v742, %v1148
  %1150 = vmatpush.msra.mxu0 %v1149
  %v1151 = vand.u32 %v1023, 4294901760
  %v1152 = vsub.f32 %v1023, %v1151
  %1153 = vmatmul.f32.gmra.mxu0 %v1152
  %v1154 = vpop.f32.mrf.mxu0
  %v1155 = vadd.f32 %v1117, %v1154
  %1156 = vdwg.mxu0
  %1157 = vmatpush.msra.mxu0 0.0
  %1158 = vmatpush.msra.mxu0 0.0
  %1159 = vmatpush.msra.mxu0 0.0
  %1160 = vmatpush.msra.mxu0 0.0
  %1161 = vmatpush.msra.mxu0 0.0
  %1162 = vmatpush.msra.mxu0 0.0
  %1163 = vmatpush.msra.mxu0 0.0
  %1164 = vmatpush.msra.mxu0 0.0
  %v1165 = vand.u32 %v749, 4294901760
  %1166 = vmatpush.msra.mxu0 %v1165
  %v1167 = vand.u32 %v748, 4294901760
  %1168 = vmatpush.msra.mxu0 %v1167
  %v1169 = vand.u32 %v747, 4294901760
  %1170 = vmatpush.msra.mxu0 %v1169
  %v1171 = vand.u32 %v746, 4294901760
  %1172 = vmatpush.msra.mxu0 %v1171
  %v1173 = vand.u32 %v745, 4294901760
  %1174 = vmatpush.msra.mxu0 %v1173
  %v1175 = vand.u32 %v744, 4294901760
  %1176 = vmatpush.msra.mxu0 %v1175
  %v1177 = vand.u32 %v743, 4294901760
  %1178 = vmatpush.msra.mxu0 %v1177
  %v1179 = vand.u32 %v742, 4294901760
  %1180 = vmatpush.msra.mxu0 %v1179
  %v1181 = vand.u32 %v1023, 4294901760
  %v1182 = vsub.f32 %v1023, %v1181
  %v1183 = vand.u32 %v1182, 4294901760
  %1184 = vmatmul.f32.gmra.mxu0 %v1183
  %v1185 = vpop.f32.mrf.mxu0
  %v1186 = vadd.f32 %v1155, %v1185
  %1187 = vdwg.mxu0
  %1188 = vmatpush.msra.mxu0 0.0
  %1189 = vmatpush.msra.mxu0 0.0
  %1190 = vmatpush.msra.mxu0 0.0
  %1191 = vmatpush.msra.mxu0 0.0
  %1192 = vmatpush.msra.mxu0 0.0
  %1193 = vmatpush.msra.mxu0 0.0
  %1194 = vmatpush.msra.mxu0 0.0
  %1195 = vmatpush.msra.mxu0 0.0
  %v1196 = vand.u32 %v749, 4294901760
  %v1197 = vsub.f32 %v749, %v1196
  %v1198 = vand.u32 %v1197, 4294901760
  %1199 = vmatpush.msra.mxu0 %v1198
  %v1200 = vand.u32 %v748, 4294901760
  %v1201 = vsub.f32 %v748, %v1200
  %v1202 = vand.u32 %v1201, 4294901760
  %1203 = vmatpush.msra.mxu0 %v1202
  %v1204 = vand.u32 %v747, 4294901760
  %v1205 = vsub.f32 %v747, %v1204
  %v1206 = vand.u32 %v1205, 4294901760
  %1207 = vmatpush.msra.mxu0 %v1206
  %v1208 = vand.u32 %v746, 4294901760
  %v1209 = vsub.f32 %v746, %v1208
  %v1210 = vand.u32 %v1209, 4294901760
  %1211 = vmatpush.msra.mxu0 %v1210
  %v1212 = vand.u32 %v745, 4294901760
  %v1213 = vsub.f32 %v745, %v1212
  %v1214 = vand.u32 %v1213, 4294901760
  %1215 = vmatpush.msra.mxu0 %v1214
  %v1216 = vand.u32 %v744, 4294901760
  %v1217 = vsub.f32 %v744, %v1216
  %v1218 = vand.u32 %v1217, 4294901760
  %1219 = vmatpush.msra.mxu0 %v1218
  %v1220 = vand.u32 %v743, 4294901760
  %v1221 = vsub.f32 %v743, %v1220
  %v1222 = vand.u32 %v1221, 4294901760
  %1223 = vmatpush.msra.mxu0 %v1222
  %v1224 = vand.u32 %v742, 4294901760
  %v1225 = vsub.f32 %v742, %v1224
  %v1226 = vand.u32 %v1225, 4294901760
  %1227 = vmatpush.msra.mxu0 %v1226
  %v1228 = vand.u32 %v1023, 4294901760
  %1229 = vmatmul.f32.gmra.mxu0 %v1228
  %v1230 = vpop.f32.mrf.mxu0
  %v1231 = vadd.f32 %v1186, %v1230
  %1232 = vdwg.mxu0
  %1233 = vmatpush.msra.mxu0 0.0
  %1234 = vmatpush.msra.mxu0 0.0
  %1235 = vmatpush.msra.mxu0 0.0
  %1236 = vmatpush.msra.mxu0 0.0
  %1237 = vmatpush.msra.mxu0 0.0
  %1238 = vmatpush.msra.mxu0 0.0
  %1239 = vmatpush.msra.mxu0 0.0
  %1240 = vmatpush.msra.mxu0 0.0
  %v1241 = vand.u32 %v749, 4294901760
  %1242 = vmatpush.msra.mxu0 %v1241
  %v1243 = vand.u32 %v748, 4294901760
  %1244 = vmatpush.msra.mxu0 %v1243
  %v1245 = vand.u32 %v747, 4294901760
  %1246 = vmatpush.msra.mxu0 %v1245
  %v1247 = vand.u32 %v746, 4294901760
  %1248 = vmatpush.msra.mxu0 %v1247
  %v1249 = vand.u32 %v745, 4294901760
  %1250 = vmatpush.msra.mxu0 %v1249
  %v1251 = vand.u32 %v744, 4294901760
  %1252 = vmatpush.msra.mxu0 %v1251
  %v1253 = vand.u32 %v743, 4294901760
  %1254 = vmatpush.msra.mxu0 %v1253
  %v1255 = vand.u32 %v742, 4294901760
  %1256 = vmatpush.msra.mxu0 %v1255
  %v1257 = vand.u32 %v1023, 4294901760
  %1258 = vmatmul.f32.gmra.mxu0 %v1257
  %v1259 = vpop.f32.mrf.mxu0
  %v1260 = vadd.f32 %v1231, %v1259
  %1261 = vdwg.mxu0
  %v1262 = vmul.f32 %v1020, 0.001953125
  %v1263 = vmul.f32 %v1260, 0.001953125
  %v1264 = vmul.f32 %v1262, %v1262
  %v1265 = vsub.f32 %v1263, %v1264
  %v1266 = vadd.f32 %v1265, 1e-05
  %v1267 = vrsqrt.pop %v1266
  %v1268 = vmul.f32 %v1267, %v1266
  %v1269 = vmul.f32 %v1268, %v1267
  %v1270 = vmul.f32 0.5, %v1269
  %v1271 = vsub.f32 1.5, %v1270
  %v1272 = vmul.f32 %v1267, %v1271
  %vm1273 = vweird.f32 %v1266
  %vm1274 = vweird.f32 %v1267
  %vm1275 = vmor %vm1273, %vm1274
  %v1276 = vsel %vm1275, %v1267, %v1272
  %v1277 = vmul.f32 %v750, %v1276
  %v1279 = vperm.slane %v1277, 0
  %v1281 = vmul.f32 %v738, %v1279
  %v1282 = vmul.f32 %v739, %v1279
  %v1283 = vmul.f32 %v740, %v1279
  %v1284 = vmul.f32 %v741, %v1279
  %v1285 = vmul.f32 %v1262, %v1277
  %v1286 = vsub.f32 %v751, %v1285
  %v1288 = vperm.slane %v1286, 0
  %v1290 = vadd.f32 %v1281, %v1288
  %v1291 = vadd.f32 %v1282, %v1288
  %v1292 = vadd.f32 %v1283, %v1288
  %v1293 = vadd.f32 %v1284, %v1288
  %v1294 = vadd.f32 %v39, %v1290
  %v1295 = vadd.f32 %v40, %v1291
  %v1296 = vadd.f32 %v41, %v1292
  %v1297 = vadd.f32 %v42, %v1293
  %1298 = vst.msk [vmem:[%s11] sm:$0xff] %vm77, %v1294
  %1299 = vst.msk [vmem:[%s11 + $0x8] sm:$0xff] %vm77, %v1295
  %1300 = vst.msk [vmem:[%s11 + $0x10] sm:$0xff] %vm77, %v1296
  %1301 = vst.msk [vmem:[%s11 + $0x18] sm:$0xff] %vm77, %v1297
  // Predicated region
  $region46: #{fwd.1} parent=0 // pred_check
    _
  $region47: #{fwd.1} parent=0 // pred_check_branch
    %1303 = sbr.rel (0) target = $region49
  $region48: #{fwd.1} parent=0 // pred_region
    _
  $region49: #{fwd.1} parent=0 // pred_fallthru
    _
  // Predicated region
  $region50: #{fwd.1} parent=0 // pred_check
    _
  $region51: #{fwd.1} parent=0 // pred_check_branch
    %1305 = sbr.rel (0) target = $region53
  $region52: #{fwd.1} parent=0 // pred_region
    _
  $region53: #{fwd.1} parent=0 // pred_fallthru
    _

</llo_original>
